<compile_context>
chip_gen: v5e
topology: v5e:2x2
jax: 0.10.0
libtpu: 0.0.40
codegen_flags: <defaults>
</compile_context>

<pallas_src>
import functools

import jax
import jax.numpy as jnp
from jax.experimental import pallas as pl
from jax.experimental.pallas import tpu as pltpu


_OUT_DIM = 4        # InferenceNet predicts 4 parameters
_OUT_PAD = 128      # lane-dense padded output width


# ----------------------------------------------------------------------------
# Kernel
# ----------------------------------------------------------------------------
def _mlp_kernel(z_ref,
                w1_ref, b1_ref,
                w2_ref, b2_ref,
                w3_ref, b3_ref,
                w4_ref, b4_ref,
                w5_ref, b5_ref,
                o_ref):
    """Fused 5-layer MLP forward for one batch tile.

    bf16 operands on the MXU, f32 accumulation; bias add in f32; ReLU in bf16
    (identical to f32 ReLU for this op).  Dropout layers are identity
    (inference mode).
    """
    x = z_ref[...].astype(jnp.bfloat16)          # in-kernel cast of the f32 tile

    def hidden_layer(x, w_ref, b_ref):
        h = jnp.dot(x, w_ref[...], preferred_element_type=jnp.float32)
        h = (h + b_ref[...]).astype(jnp.bfloat16)
        return jnp.maximum(h, 0.0)               # bf16 ReLU

    x = hidden_layer(x, w1_ref, b1_ref)
    x = hidden_layer(x, w2_ref, b2_ref)
    x = hidden_layer(x, w3_ref, b3_ref)
    x = hidden_layer(x, w4_ref, b4_ref)

    h = jnp.dot(x, w5_ref[...], preferred_element_type=jnp.float32) + b5_ref[...]
    o_ref[...] = h.astype(o_ref.dtype)           # bf16 store, lane-dense


# ----------------------------------------------------------------------------
# Parameter init (matches nn.init.kaiming_normal_(fan_in, relu) + zero bias)
# ----------------------------------------------------------------------------
def init_params(key, embedding_dim, hidden_dim):
    dims = [(embedding_dim, hidden_dim),
            (hidden_dim, hidden_dim),
            (hidden_dim, hidden_dim),
            (hidden_dim, hidden_dim // 2),
            (hidden_dim // 2, _OUT_DIM)]
    params = []
    for (fan_in, fan_out) in dims:
        key, sub = jax.random.split(key)
        std = (2.0 / fan_in) ** 0.5
        w = std * jax.random.normal(sub, (fan_in, fan_out), dtype=jnp.float32)
        b = jnp.zeros((1, fan_out), dtype=jnp.float32)
        params.append((w, b))
    return params


# ----------------------------------------------------------------------------
# Hardware-aware tiling policy
# ----------------------------------------------------------------------------
def _tpu_info():
    try:
        return pltpu.get_tpu_info()
    except Exception:
        return None


def _vmem_capacity_bytes(info):
    if info is not None:
        cap = getattr(info, "vmem_capacity_bytes", None)
        if isinstance(cap, int) and cap > 0:
            return cap
    return 64 * 1024 * 1024     # conservative fallback (v7x-sized VMEM)


def _num_tensorcores(info):
    if info is not None:
        for name in ("num_cores", "core_count", "num_tensorcores"):
            v = getattr(info, name, None)
            if isinstance(v, int) and v > 0:
                return v
    v = getattr(jax.devices()[0], "num_cores", None)
    if isinstance(v, int) and v > 0:
        return v
    return 1                    # safe default: single TensorCore


def _round_up(x, m):
    return ((x + m - 1) // m) * m


def _pick_tiling(B, E, hidden_dims, weight_bytes):
    """Return (block_b, padded_B, vmem_limit_bytes)."""
    info = _tpu_info()
    capacity = _vmem_capacity_bytes(info)
    num_cores = _num_tensorcores(info)

    # Scoped VMEM limit: ~64 MiB on 128 MiB parts (v5e/v6e), ~48 MiB on 64 MiB
    # parts (v7x).
    if capacity >= 96 * 1024 * 1024:
        vmem_limit = 64 * 1024 * 1024
    else:
        vmem_limit = min(capacity * 3 // 4, 48 * 1024 * 1024)

    # Per-row VMEM bytes: double-buffered f32 z tile + double-buffered bf16
    # padded output tile + (3 live f32 intermediates + 1 bf16 copy) at the
    # widest layer.
    h_max = max(list(hidden_dims) + [_OUT_PAD, E])
    per_row = 2 * 4 * E + 2 * 2 * _OUT_PAD + (3 * 4 + 2) * h_max

    # Batch-scaled budget = scoped limit minus resident (single-buffered)
    # weights minus headroom for compiler scratch.
    budget = max(vmem_limit - weight_bytes - 4 * 1024 * 1024, 1 * 1024 * 1024)
    cap = max(8, budget // per_row)
    cap8 = max(8, (cap // 8) * 8)

    if num_cores <= 1:
        # Single TensorCore: the grid is a serial loop; one full-batch tile is
        # strictly best when it fits (block_b == B == full dim satisfies the
        # (8,128) rule even for odd B).
        if B <= cap:
            return B, B, vmem_limit
        block_b = cap8
        return block_b, _round_up(B, block_b), vmem_limit

    # Multiple TensorCores: pick a step count that is a multiple of the core
    # count so the "parallel" batch axis load-balances.
    steps = num_cores
    while True:
        block_b = _round_up(-(-B // steps), 8)
        if block_b <= cap8 or block_b <= 8:
            break
        steps += num_cores
    return block_b, block_b * steps, vmem_limit


# ----------------------------------------------------------------------------
# Forward
# ----------------------------------------------------------------------------
@jax.jit
def inference_net_forward(z, params):
    B, E = z.shape
    hidden_dims = [int(w.shape[1]) for (w, _) in params[:-1]]

    # bf16 weights for the MXU, f32 biases.  Final layer zero-padded to 128
    # output lanes -> lane-dense stores + MXU-aligned N; wrapper slices back.
    flat = []
    for i, (w, b) in enumerate(params):
        if i == len(params) - 1:
            w = jnp.pad(w, ((0, 0), (0, _OUT_PAD - w.shape[1])))
            b = jnp.pad(b, ((0, 0), (0, _OUT_PAD - b.shape[1])))
        flat.append(w.astype(jnp.bfloat16))
        flat.append(b.astype(jnp.float32))

    weight_bytes = sum(int(a.size) * a.dtype.itemsize for a in flat)
    block_b, padded_B, vmem_limit = _pick_tiling(B, E, hidden_dims, weight_bytes)

    if padded_B != B:
        z = jnp.pad(z, ((0, padded_B - B), (0, 0)))

    # Weights/biases: full-extent blocks, constant index_map, single-buffered
    # (pl.Buffered(1)) -> resident in VMEM for the whole grid, no re-DMA and
    # no wasted second buffer.
    def resident_spec(arr):
        return pl.BlockSpec(arr.shape, lambda i: (0, 0),
                            pipeline_mode=pl.Buffered(1))

    in_specs = [pl.BlockSpec((block_b, E), lambda i: (i, 0))]   # f32 z tiles
    in_specs += [resident_spec(a) for a in flat]
    out_specs = pl.BlockSpec((block_b, _OUT_PAD), lambda i: (i, 0))

    # Cost estimate (advisory): true flops (unpadded final layer), f32 z read,
    # resident weights, bf16 padded output write.
    flops = 2 * padded_B * sum(int(w.shape[0]) * int(w.shape[1])
                               for (w, _) in params)
    bytes_accessed = (padded_B * E * 4
                      + weight_bytes
                      + padded_B * _OUT_PAD * 2)
    cost = pl.CostEstimate(flops=flops, transcendentals=0,
                           bytes_accessed=bytes_accessed)

    out_padded = pl.pallas_call(
        _mlp_kernel,
        out_shape=jax.ShapeDtypeStruct((padded_B, _OUT_PAD), jnp.bfloat16),
        grid_spec=pltpu.PrefetchScalarGridSpec(
            num_scalar_prefetch=0,
            grid=(padded_B // block_b,),
            in_specs=in_specs,
            out_specs=out_specs,
        ),
        compiler_params=pltpu.CompilerParams(
            dimension_semantics=("parallel",),
            vmem_limit_bytes=int(vmem_limit),
        ),
        cost_estimate=cost,
    )(z, *flat)

    return out_padded[:B, :_OUT_DIM].astype(jnp.float32)


# ----------------------------------------------------------------------------
# Pure-JAX reference (same bf16-operand / f32-accumulate recipe)
# ----------------------------------------------------------------------------
def reference_forward(z, params):
    x = z.astype(jnp.bfloat16)
    out = None
    for i, (w, b) in enumerate(params):
        h = jnp.dot(x, w.astype(jnp.bfloat16),
                    preferred_element_type=jnp.float32) + b
        if i < len(params) - 1:
            x = jnp.maximum(h, 0.0).astype(jnp.bfloat16)
        else:
            out = h
    return out


if __name__ == "__main__":
    embedding_dim = 32
    hidden_dim = 64            # small for the example; PyTorch default is 512
    batch = 512

    key = jax.random.PRNGKey(0)
    key, zkey = jax.random.split(key)
    z = jax.random.normal(zkey, (batch, embedding_dim), dtype=jnp.float32)

    params = init_params(key, embedding_dim, hidden_dim)

    out = inference_net_forward(z, params)
    out = jax.block_until_ready(out)
    assert out.shape == (batch, _OUT_DIM), out.shape

    ref = reference_forward(z, params)
    assert jnp.allclose(out, ref, atol=2e-2, rtol=2e-2), "mismatch vs reference"

    # Robustness check: batch not a multiple of 8 (exercises the padding path).
    z_odd = jax.random.normal(jax.random.PRNGKey(1), (100, embedding_dim),
                              dtype=jnp.float32)
    out_odd = jax.block_until_ready(inference_net_forward(z_odd, params))
    ref_odd = reference_forward(z_odd, params)
    assert out_odd.shape == (100, _OUT_DIM), out_odd.shape
    assert jnp.allclose(out_odd, ref_odd, atol=2e-2, rtol=2e-2), "mismatch (odd batch)"

    print("KERNEL_OK")
</pallas_src>

<mosaic_0001>
module attributes {stable_mosaic.version = 11 : i64} {
  func.func @_mlp_kernel(%arg0: i32, %arg1: memref<512x32xf32, #tpu.memory_space<vmem>>, %arg2: memref<32x64xbf16, #tpu.memory_space<vmem>>, %arg3: memref<1x64xf32, #tpu.memory_space<vmem>>, %arg4: memref<64x64xbf16, #tpu.memory_space<vmem>>, %arg5: memref<1x64xf32, #tpu.memory_space<vmem>>, %arg6: memref<64x64xbf16, #tpu.memory_space<vmem>>, %arg7: memref<1x64xf32, #tpu.memory_space<vmem>>, %arg8: memref<64x32xbf16, #tpu.memory_space<vmem>>, %arg9: memref<1x32xf32, #tpu.memory_space<vmem>>, %arg10: memref<32x128xbf16, #tpu.memory_space<vmem>>, %arg11: memref<1x128xf32, #tpu.memory_space<vmem>>, %arg12: memref<512x128xbf16, #tpu.memory_space<vmem>>) attributes {dimension_semantics = [#tpu.dimension_semantics<parallel>], iteration_bounds = array<i64: 1>, scalar_prefetch = 0 : i64, scratch_operands = 0 : i64, tpu.core_type = #tpu.core_type<tc>, window_params = [{transform_indices = @transform_0, window_bounds = array<i64: 512, 32>}, {pipeline_mode = #tpu.pipeline_mode<synchronous>, transform_indices = @transform_1, window_bounds = array<i64: 32, 64>}, {pipeline_mode = #tpu.pipeline_mode<synchronous>, transform_indices = @transform_2, window_bounds = array<i64: 1, 64>}, {pipeline_mode = #tpu.pipeline_mode<synchronous>, transform_indices = @transform_3, window_bounds = array<i64: 64, 64>}, {pipeline_mode = #tpu.pipeline_mode<synchronous>, transform_indices = @transform_4, window_bounds = array<i64: 1, 64>}, {pipeline_mode = #tpu.pipeline_mode<synchronous>, transform_indices = @transform_5, window_bounds = array<i64: 64, 64>}, {pipeline_mode = #tpu.pipeline_mode<synchronous>, transform_indices = @transform_6, window_bounds = array<i64: 1, 64>}, {pipeline_mode = #tpu.pipeline_mode<synchronous>, transform_indices = @transform_7, window_bounds = array<i64: 64, 32>}, {pipeline_mode = #tpu.pipeline_mode<synchronous>, transform_indices = @transform_8, window_bounds = array<i64: 1, 32>}, {pipeline_mode = #tpu.pipeline_mode<synchronous>, transform_indices = @transform_9, window_bounds = array<i64: 32, 128>}, {pipeline_mode = #tpu.pipeline_mode<synchronous>, transform_indices = @transform_10, window_bounds = array<i64: 1, 128>}, {transform_indices = @transform_11, window_bounds = array<i64: 512, 128>}]} {
    %c0 = arith.constant 0 : index
    %c0_0 = arith.constant 0 : index
    %0 = vector.load %arg1[%c0, %c0_0] : memref<512x32xf32, #tpu.memory_space<vmem>>, vector<512x32xf32>
    %1 = arith.truncf %0 : vector<512x32xf32> to vector<512x32xbf16>
    %c0_1 = arith.constant 0 : index
    %c0_2 = arith.constant 0 : index
    %2 = vector.load %arg2[%c0_1, %c0_2] : memref<32x64xbf16, #tpu.memory_space<vmem>>, vector<32x64xbf16>
    %cst = arith.constant dense<0.000000e+00> : vector<512x64xf32>
    %3 = tpu.matmul %1, %2, %cst {dimension_numbers = #tpu.dot_dimension_numbers<[1], [0], [0], [1], [0, 0, 1, 1], [], []>} : vector<512x32xbf16>, vector<32x64xbf16>, vector<512x64xf32> -> vector<512x64xf32>
    %c0_3 = arith.constant 0 : index
    %c0_4 = arith.constant 0 : index
    %4 = vector.load %arg3[%c0_3, %c0_4] : memref<1x64xf32, #tpu.memory_space<vmem>>, vector<1x64xf32>
    %5 = vector.broadcast %4 : vector<1x64xf32> to vector<512x64xf32>
    %6 = arith.addf %3, %5 : vector<512x64xf32>
    %7 = arith.truncf %6 : vector<512x64xf32> to vector<512x64xbf16>
    %cst_5 = arith.constant 0.000000e+00 : bf16
    %8 = vector.broadcast %cst_5 : bf16 to vector<512x64xbf16>
    %9 = arith.maximumf %7, %8 : vector<512x64xbf16>
    %c0_6 = arith.constant 0 : index
    %c0_7 = arith.constant 0 : index
    %10 = vector.load %arg4[%c0_6, %c0_7] : memref<64x64xbf16, #tpu.memory_space<vmem>>, vector<64x64xbf16>
    %cst_8 = arith.constant dense<0.000000e+00> : vector<512x64xf32>
    %11 = tpu.matmul %9, %10, %cst_8 {dimension_numbers = #tpu.dot_dimension_numbers<[1], [0], [0], [1], [0, 0, 1, 1], [], []>} : vector<512x64xbf16>, vector<64x64xbf16>, vector<512x64xf32> -> vector<512x64xf32>
    %c0_9 = arith.constant 0 : index
    %c0_10 = arith.constant 0 : index
    %12 = vector.load %arg5[%c0_9, %c0_10] : memref<1x64xf32, #tpu.memory_space<vmem>>, vector<1x64xf32>
    %13 = vector.broadcast %12 : vector<1x64xf32> to vector<512x64xf32>
    %14 = arith.addf %11, %13 : vector<512x64xf32>
    %15 = arith.truncf %14 : vector<512x64xf32> to vector<512x64xbf16>
    %cst_11 = arith.constant 0.000000e+00 : bf16
    %16 = vector.broadcast %cst_11 : bf16 to vector<512x64xbf16>
    %17 = arith.maximumf %15, %16 : vector<512x64xbf16>
    %c0_12 = arith.constant 0 : index
    %c0_13 = arith.constant 0 : index
    %18 = vector.load %arg6[%c0_12, %c0_13] : memref<64x64xbf16, #tpu.memory_space<vmem>>, vector<64x64xbf16>
    %cst_14 = arith.constant dense<0.000000e+00> : vector<512x64xf32>
    %19 = tpu.matmul %17, %18, %cst_14 {dimension_numbers = #tpu.dot_dimension_numbers<[1], [0], [0], [1], [0, 0, 1, 1], [], []>} : vector<512x64xbf16>, vector<64x64xbf16>, vector<512x64xf32> -> vector<512x64xf32>
    %c0_15 = arith.constant 0 : index
    %c0_16 = arith.constant 0 : index
    %20 = vector.load %arg7[%c0_15, %c0_16] : memref<1x64xf32, #tpu.memory_space<vmem>>, vector<1x64xf32>
    %21 = vector.broadcast %20 : vector<1x64xf32> to vector<512x64xf32>
    %22 = arith.addf %19, %21 : vector<512x64xf32>
    %23 = arith.truncf %22 : vector<512x64xf32> to vector<512x64xbf16>
    %cst_17 = arith.constant 0.000000e+00 : bf16
    %24 = vector.broadcast %cst_17 : bf16 to vector<512x64xbf16>
    %25 = arith.maximumf %23, %24 : vector<512x64xbf16>
    %c0_18 = arith.constant 0 : index
    %c0_19 = arith.constant 0 : index
    %26 = vector.load %arg8[%c0_18, %c0_19] : memref<64x32xbf16, #tpu.memory_space<vmem>>, vector<64x32xbf16>
    %cst_20 = arith.constant dense<0.000000e+00> : vector<512x32xf32>
    %27 = tpu.matmul %25, %26, %cst_20 {dimension_numbers = #tpu.dot_dimension_numbers<[1], [0], [0], [1], [0, 0, 1, 1], [], []>} : vector<512x64xbf16>, vector<64x32xbf16>, vector<512x32xf32> -> vector<512x32xf32>
    %c0_21 = arith.constant 0 : index
    %c0_22 = arith.constant 0 : index
    %28 = vector.load %arg9[%c0_21, %c0_22] : memref<1x32xf32, #tpu.memory_space<vmem>>, vector<1x32xf32>
    %29 = vector.broadcast %28 : vector<1x32xf32> to vector<512x32xf32>
    %30 = arith.addf %27, %29 : vector<512x32xf32>
    %31 = arith.truncf %30 : vector<512x32xf32> to vector<512x32xbf16>
    %cst_23 = arith.constant 0.000000e+00 : bf16
    %32 = vector.broadcast %cst_23 : bf16 to vector<512x32xbf16>
    %33 = arith.maximumf %31, %32 : vector<512x32xbf16>
    %c0_24 = arith.constant 0 : index
    %c0_25 = arith.constant 0 : index
    %34 = vector.load %arg10[%c0_24, %c0_25] : memref<32x128xbf16, #tpu.memory_space<vmem>>, vector<32x128xbf16>
    %cst_26 = arith.constant dense<0.000000e+00> : vector<512x128xf32>
    %35 = tpu.matmul %33, %34, %cst_26 {dimension_numbers = #tpu.dot_dimension_numbers<[1], [0], [0], [1], [0, 0, 1, 1], [], []>} : vector<512x32xbf16>, vector<32x128xbf16>, vector<512x128xf32> -> vector<512x128xf32>
    %c0_27 = arith.constant 0 : index
    %c0_28 = arith.constant 0 : index
    %36 = vector.load %arg11[%c0_27, %c0_28] : memref<1x128xf32, #tpu.memory_space<vmem>>, vector<1x128xf32>
    %37 = vector.broadcast %36 : vector<1x128xf32> to vector<512x128xf32>
    %38 = arith.addf %35, %37 : vector<512x128xf32>
    %39 = arith.truncf %38 : vector<512x128xf32> to vector<512x128xbf16>
    %c0_29 = arith.constant 0 : index
    %c0_30 = arith.constant 0 : index
    %40 = vector.load %arg12[%c0_29, %c0_30] : memref<512x128xbf16, #tpu.memory_space<vmem>>, vector<512x128xbf16>
    tpu.vector_store %arg12[%c0_29, %c0_30], %39 {strides = array<i32>} : memref<512x128xbf16, #tpu.memory_space<vmem>>, vector<512x128xbf16>,
    return
  }
  func.func @transform_0(%arg0: i32) -> (i32, i32) {
    %c0_i32 = arith.constant 0 : i32
    %c0_i32_0 = arith.constant 0 : i32
    return %arg0, %c0_i32 : i32, i32
  }
  func.func @transform_1(%arg0: i32) -> (i32, i32) {
    %c0_i32 = arith.constant 0 : i32
    %c0_i32_0 = arith.constant 0 : i32
    %c0_i32_1 = arith.constant 0 : i32
    return %c0_i32, %c0_i32_0 : i32, i32
  }
  func.func @transform_2(%arg0: i32) -> (i32, i32) {
    %c0_i32 = arith.constant 0 : i32
    %c0_i32_0 = arith.constant 0 : i32
    %c0_i32_1 = arith.constant 0 : i32
    return %c0_i32, %c0_i32_0 : i32, i32
  }
  func.func @transform_3(%arg0: i32) -> (i32, i32) {
    %c0_i32 = arith.constant 0 : i32
    %c0_i32_0 = arith.constant 0 : i32
    %c0_i32_1 = arith.constant 0 : i32
    return %c0_i32, %c0_i32_0 : i32, i32
  }
  func.func @transform_4(%arg0: i32) -> (i32, i32) {
    %c0_i32 = arith.constant 0 : i32
    %c0_i32_0 = arith.constant 0 : i32
    %c0_i32_1 = arith.constant 0 : i32
    return %c0_i32, %c0_i32_0 : i32, i32
  }
  func.func @transform_5(%arg0: i32) -> (i32, i32) {
    %c0_i32 = arith.constant 0 : i32
    %c0_i32_0 = arith.constant 0 : i32
    %c0_i32_1 = arith.constant 0 : i32
    return %c0_i32, %c0_i32_0 : i32, i32
  }
  func.func @transform_6(%arg0: i32) -> (i32, i32) {
    %c0_i32 = arith.constant 0 : i32
    %c0_i32_0 = arith.constant 0 : i32
    %c0_i32_1 = arith.constant 0 : i32
    return %c0_i32, %c0_i32_0 : i32, i32
  }
  func.func @transform_7(%arg0: i32) -> (i32, i32) {
    %c0_i32 = arith.constant 0 : i32
    %c0_i32_0 = arith.constant 0 : i32
    %c0_i32_1 = arith.constant 0 : i32
    return %c0_i32, %c0_i32_0 : i32, i32
  }
  func.func @transform_8(%arg0: i32) -> (i32, i32) {
    %c0_i32 = arith.constant 0 : i32
    %c0_i32_0 = arith.constant 0 : i32
    %c0_i32_1 = arith.constant 0 : i32
    return %c0_i32, %c0_i32_0 : i32, i32
  }
  func.func @transform_9(%arg0: i32) -> (i32, i32) {
    %c0_i32 = arith.constant 0 : i32
    %c0_i32_0 = arith.constant 0 : i32
    %c0_i32_1 = arith.constant 0 : i32
    return %c0_i32, %c0_i32_0 : i32, i32
  }
  func.func @transform_10(%arg0: i32) -> (i32, i32) {
    %c0_i32 = arith.constant 0 : i32
    %c0_i32_0 = arith.constant 0 : i32
    %c0_i32_1 = arith.constant 0 : i32
    return %c0_i32, %c0_i32_0 : i32, i32
  }
  func.func @transform_11(%arg0: i32) -> (i32, i32) {
    %c0_i32 = arith.constant 0 : i32
    %c0_i32_0 = arith.constant 0 : i32
    return %arg0, %c0_i32 : i32, i32
  }
}

</mosaic_0001>

<llo_original>
// kernel: inference_net_forward.1
$region0: #{inference_net_forward.1}
  #allocation0 [shape = 'u32[]', space=smem, size = 0x4, offset = 0x4, fixed_abs, tag = 'smem constant byte address 0x4 - core index']
  #allocation1 [shape = 'u32[72,128]{1,0:T(1,128)}', space=vmem, size = 0x9000, scoped, tag = 'internal scratch']
  %s0 = inlined_call_operand.vmem [shape: f32[512,32], index: 0, kind: input, shape index: {}]
  %s1 = inlined_call_operand.vmem [shape: bf16[32,64], index: 1, kind: input, shape index: {}]
  %s2 = inlined_call_operand.vmem [shape: f32[1,64], index: 2, kind: input, shape index: {}]
  %s3 = inlined_call_operand.vmem [shape: bf16[64,64], index: 3, kind: input, shape index: {}]
  %s4 = inlined_call_operand.vmem [shape: f32[1,64], index: 4, kind: input, shape index: {}]
  %s5 = inlined_call_operand.vmem [shape: bf16[64,64], index: 5, kind: input, shape index: {}]
  %s6 = inlined_call_operand.vmem [shape: f32[1,64], index: 6, kind: input, shape index: {}]
  %s7 = inlined_call_operand.vmem [shape: bf16[64,32], index: 7, kind: input, shape index: {}]
  %s8 = inlined_call_operand.vmem [shape: f32[1,32], index: 8, kind: input, shape index: {}]
  %s9 = inlined_call_operand.vmem [shape: bf16[32,128], index: 9, kind: input, shape index: {}]
  %s10 = inlined_call_operand.vmem [shape: f32[1,128], index: 10, kind: input, shape index: {}]
  %s11 = inlined_call_operand.vmem [shape: bf16[512,128], index: 11, kind: output, shape index: {}]
  %s12 = sld [smem:[#allocation0]]
  $region54: #{inference_net_forward.1} parent=0
    _
  %s14 = ssub.s32 1, %s12
  %s15 = scalar_select 0, %s14, %s12
  // Predicated region
  $region2: #{inference_net_forward.1} parent=0 // pred_check
    _
  $region3: #{inference_net_forward.1} parent=0 // pred_check_branch
    %17 = sbr.rel (0) target = $region5
  $region4: #{inference_net_forward.1} parent=0 // pred_region
    _
  $region5: #{inference_net_forward.1} parent=0 // pred_fallthru
    _
  // Predicated region
  $region6: #{inference_net_forward.1} parent=0 // pred_check
    _
  $region7: #{inference_net_forward.1} parent=0 // pred_check_branch
    %19 = sbr.rel (0) target = $region9
  $region8: #{inference_net_forward.1} parent=0 // pred_region
    _
  $region9: #{inference_net_forward.1} parent=0 // pred_fallthru
    _
  // Predicated region
  $region10: #{inference_net_forward.1} parent=0 // pred_check
    _
  $region11: #{inference_net_forward.1} parent=0 // pred_check_branch
    %21 = sbr.rel (0) target = $region13
  $region12: #{inference_net_forward.1} parent=0 // pred_region
    _
  $region13: #{inference_net_forward.1} parent=0 // pred_fallthru
    _
  // Predicated region
  $region14: #{inference_net_forward.1} parent=0 // pred_check
    _
  $region15: #{inference_net_forward.1} parent=0 // pred_check_branch
    %23 = sbr.rel (0) target = $region17
  $region16: #{inference_net_forward.1} parent=0 // pred_region
    _
  $region17: #{inference_net_forward.1} parent=0 // pred_fallthru
    _
  // Predicated region
  $region18: #{inference_net_forward.1} parent=0 // pred_check
    _
  $region19: #{inference_net_forward.1} parent=0 // pred_check_branch
    %25 = sbr.rel (0) target = $region21
  $region20: #{inference_net_forward.1} parent=0 // pred_region
    _
  $region21: #{inference_net_forward.1} parent=0 // pred_fallthru
    _
  // Predicated region
  $region22: #{inference_net_forward.1} parent=0 // pred_check
    _
  $region23: #{inference_net_forward.1} parent=0 // pred_check_branch
    %27 = sbr.rel (0) target = $region25
  $region24: #{inference_net_forward.1} parent=0 // pred_region
    _
  $region25: #{inference_net_forward.1} parent=0 // pred_fallthru
    _
  // Predicated region
  $region26: #{inference_net_forward.1} parent=0 // pred_check
    _
  $region27: #{inference_net_forward.1} parent=0 // pred_check_branch
    %29 = sbr.rel (0) target = $region29
  $region28: #{inference_net_forward.1} parent=0 // pred_region
    _
  $region29: #{inference_net_forward.1} parent=0 // pred_fallthru
    _
  // Predicated region
  $region30: #{inference_net_forward.1} parent=0 // pred_check
    _
  $region31: #{inference_net_forward.1} parent=0 // pred_check_branch
    %31 = sbr.rel (0) target = $region33
  $region32: #{inference_net_forward.1} parent=0 // pred_region
    _
  $region33: #{inference_net_forward.1} parent=0 // pred_fallthru
    _
  // Predicated region
  $region34: #{inference_net_forward.1} parent=0 // pred_check
    _
  $region35: #{inference_net_forward.1} parent=0 // pred_check_branch
    %33 = sbr.rel (0) target = $region37
  $region36: #{inference_net_forward.1} parent=0 // pred_region
    _
  $region37: #{inference_net_forward.1} parent=0 // pred_fallthru
    _
  // Predicated region
  $region38: #{inference_net_forward.1} parent=0 // pred_check
    _
  $region39: #{inference_net_forward.1} parent=0 // pred_check_branch
    %35 = sbr.rel (0) target = $region41
  $region40: #{inference_net_forward.1} parent=0 // pred_region
    _
  $region41: #{inference_net_forward.1} parent=0 // pred_fallthru
    _
  // Predicated region
  $region42: #{inference_net_forward.1} parent=0 // pred_check
    _
  $region43: #{inference_net_forward.1} parent=0 // pred_check_branch
    %37 = sbr.rel (0) target = $region45
  $region44: #{inference_net_forward.1} parent=0 // pred_region
    _
  $region45: #{inference_net_forward.1} parent=0 // pred_fallthru
    _
  %v39 = vld [vmem:[%s0] sm:$0xff]
  %v40 = vld [vmem:[%s0 + $0x8] sm:$0xff]
  %v41 = vld [vmem:[%s0 + $0x10] sm:$0xff]
  %v42 = vld [vmem:[%s0 + $0x18] sm:$0xff]
  %v43 = vld [vmem:[%s0 + $0x20] sm:$0xff]
  %v44 = vld [vmem:[%s0 + $0x28] sm:$0xff]
  %v45 = vld [vmem:[%s0 + $0x30] sm:$0xff]
  %v46 = vld [vmem:[%s0 + $0x38] sm:$0xff]
  %v47 = vld [vmem:[%s0 + $0x40] sm:$0xff]
  %v48 = vld [vmem:[%s0 + $0x48] sm:$0xff]
  %v49 = vld [vmem:[%s0 + $0x50] sm:$0xff]
  %v50 = vld [vmem:[%s0 + $0x58] sm:$0xff]
  %v51 = vld [vmem:[%s0 + $0x60] sm:$0xff]
  %v52 = vld [vmem:[%s0 + $0x68] sm:$0xff]
  %v53 = vld [vmem:[%s0 + $0x70] sm:$0xff]
  %v54 = vld [vmem:[%s0 + $0x78] sm:$0xff]
  %v55 = vld [vmem:[%s0 + $0x80] sm:$0xff]
  %v56 = vld [vmem:[%s0 + $0x88] sm:$0xff]
  %v57 = vld [vmem:[%s0 + $0x90] sm:$0xff]
  %v58 = vld [vmem:[%s0 + $0x98] sm:$0xff]
  %v59 = vld [vmem:[%s0 + $0xa0] sm:$0xff]
  %v60 = vld [vmem:[%s0 + $0xa8] sm:$0xff]
  %v61 = vld [vmem:[%s0 + $0xb0] sm:$0xff]
  %v62 = vld [vmem:[%s0 + $0xb8] sm:$0xff]
  %v63 = vld [vmem:[%s0 + $0xc0] sm:$0xff]
  %v64 = vld [vmem:[%s0 + $0xc8] sm:$0xff]
  %v65 = vld [vmem:[%s0 + $0xd0] sm:$0xff]
  %v66 = vld [vmem:[%s0 + $0xd8] sm:$0xff]
  %v67 = vld [vmem:[%s0 + $0xe0] sm:$0xff]
  %v68 = vld [vmem:[%s0 + $0xe8] sm:$0xff]
  %v69 = vld [vmem:[%s0 + $0xf0] sm:$0xff]
  %v70 = vld [vmem:[%s0 + $0xf8] sm:$0xff]
  %v71 = vld [vmem:[%s0 + $0x100] sm:$0xff]
  %v72 = vld [vmem:[%s0 + $0x108] sm:$0xff]
  %v73 = vld [vmem:[%s0 + $0x110] sm:$0xff]
  %v74 = vld [vmem:[%s0 + $0x118] sm:$0xff]
  %v75 = vld [vmem:[%s0 + $0x120] sm:$0xff]
  %v76 = vld [vmem:[%s0 + $0x128] sm:$0xff]
  %v77 = vld [vmem:[%s0 + $0x130] sm:$0xff]
  %v78 = vld [vmem:[%s0 + $0x138] sm:$0xff]
  %v79 = vld [vmem:[%s0 + $0x140] sm:$0xff]
  %v80 = vld [vmem:[%s0 + $0x148] sm:$0xff]
  %v81 = vld [vmem:[%s0 + $0x150] sm:$0xff]
  %v82 = vld [vmem:[%s0 + $0x158] sm:$0xff]
  %v83 = vld [vmem:[%s0 + $0x160] sm:$0xff]
  %v84 = vld [vmem:[%s0 + $0x168] sm:$0xff]
  %v85 = vld [vmem:[%s0 + $0x170] sm:$0xff]
  %v86 = vld [vmem:[%s0 + $0x178] sm:$0xff]
  %v87 = vld [vmem:[%s0 + $0x180] sm:$0xff]
  %v88 = vld [vmem:[%s0 + $0x188] sm:$0xff]
  %v89 = vld [vmem:[%s0 + $0x190] sm:$0xff]
  %v90 = vld [vmem:[%s0 + $0x198] sm:$0xff]
  %v91 = vld [vmem:[%s0 + $0x1a0] sm:$0xff]
  %v92 = vld [vmem:[%s0 + $0x1a8] sm:$0xff]
  %v93 = vld [vmem:[%s0 + $0x1b0] sm:$0xff]
  %v94 = vld [vmem:[%s0 + $0x1b8] sm:$0xff]
  %v95 = vld [vmem:[%s0 + $0x1c0] sm:$0xff]
  %v96 = vld [vmem:[%s0 + $0x1c8] sm:$0xff]
  %v97 = vld [vmem:[%s0 + $0x1d0] sm:$0xff]
  %v98 = vld [vmem:[%s0 + $0x1d8] sm:$0xff]
  %v99 = vld [vmem:[%s0 + $0x1e0] sm:$0xff]
  %v100 = vld [vmem:[%s0 + $0x1e8] sm:$0xff]
  %v101 = vld [vmem:[%s0 + $0x1f0] sm:$0xff]
  %v102 = vld [vmem:[%s0 + $0x1f8] sm:$0xff]
  %v103 = vpack.c.bf16 %v40, %v39
  %v104 = vpack.c.bf16 %v42, %v41
  %v105 = vpack.c.bf16 %v44, %v43
  %v106 = vpack.c.bf16 %v46, %v45
  %v107 = vpack.c.bf16 %v48, %v47
  %v108 = vpack.c.bf16 %v50, %v49
  %v109 = vpack.c.bf16 %v52, %v51
  %v110 = vpack.c.bf16 %v54, %v53
  %v111 = vpack.c.bf16 %v56, %v55
  %v112 = vpack.c.bf16 %v58, %v57
  %v113 = vpack.c.bf16 %v60, %v59
  %v114 = vpack.c.bf16 %v62, %v61
  %v115 = vpack.c.bf16 %v64, %v63
  %v116 = vpack.c.bf16 %v66, %v65
  %v117 = vpack.c.bf16 %v68, %v67
  %v118 = vpack.c.bf16 %v70, %v69
  %v119 = vpack.c.bf16 %v72, %v71
  %v120 = vpack.c.bf16 %v74, %v73
  %v121 = vpack.c.bf16 %v76, %v75
  %v122 = vpack.c.bf16 %v78, %v77
  %v123 = vpack.c.bf16 %v80, %v79
  %v124 = vpack.c.bf16 %v82, %v81
  %v125 = vpack.c.bf16 %v84, %v83
  %v126 = vpack.c.bf16 %v86, %v85
  %v127 = vpack.c.bf16 %v88, %v87
  %v128 = vpack.c.bf16 %v90, %v89
  %v129 = vpack.c.bf16 %v92, %v91
  %v130 = vpack.c.bf16 %v94, %v93
  %v131 = vpack.c.bf16 %v96, %v95
  %v132 = vpack.c.bf16 %v98, %v97
  %v133 = vpack.c.bf16 %v100, %v99
  %v134 = vpack.c.bf16 %v102, %v101
  %v135 = vld [vmem:[%s1] sm:$0xf]
  %v136 = vld [vmem:[%s1 + $0x4] sm:$0xf]
  %v137 = vld [vmem:[%s1 + $0x8] sm:$0xf]
  %v138 = vld [vmem:[%s1 + $0xc] sm:$0xf]
  %v139 = vld [vmem:[%s2] sm:$0x1]
  %v141 = vperm.slane %v139, 0
  %v147 = vunpack.c.l.b16 %v135
  %v148 = vunpack.c.l.b16 %v136
  %v149 = vunpack.c.l.b16 %v137
  %v150 = vunpack.c.l.b16 %v138
  %v151 = vpack.c.b16 %v148, %v147
  %v152 = vpack.c.b16 %v150, %v149
  %vm155 = vcmask 261120
  %v157 = vsel %vm155, %v103, 0
  %v160 = vsel %vm155, %v104, 0
  %v163 = vsel %vm155, %v105, 0
  %v166 = vsel %vm155, %v106, 0
  %v169 = vsel %vm155, %v107, 0
  %v172 = vsel %vm155, %v108, 0
  %v175 = vsel %vm155, %v109, 0
  %v178 = vsel %vm155, %v110, 0
  %v181 = vsel %vm155, %v111, 0
  %v184 = vsel %vm155, %v112, 0
  %v187 = vsel %vm155, %v113, 0
  %v190 = vsel %vm155, %v114, 0
  %v193 = vsel %vm155, %v115, 0
  %v196 = vsel %vm155, %v116, 0
  %v199 = vsel %vm155, %v117, 0
  %v202 = vsel %vm155, %v118, 0
  %v205 = vsel %vm155, %v119, 0
  %v208 = vsel %vm155, %v120, 0
  %v211 = vsel %vm155, %v121, 0
  %v214 = vsel %vm155, %v122, 0
  %v217 = vsel %vm155, %v123, 0
  %v220 = vsel %vm155, %v124, 0
  %v223 = vsel %vm155, %v125, 0
  %v226 = vsel %vm155, %v126, 0
  %v229 = vsel %vm155, %v127, 0
  %v232 = vsel %vm155, %v128, 0
  %v235 = vsel %vm155, %v129, 0
  %v238 = vsel %vm155, %v130, 0
  %v241 = vsel %vm155, %v131, 0
  %v244 = vsel %vm155, %v132, 0
  %v247 = vsel %vm155, %v133, 0
  %v250 = vsel %vm155, %v134, 0
  %252 = vmatpush.bf16.msra.mxu0 0
  %253 = vmatpush.bf16.msra.mxu0 0
  %254 = vmatpush.bf16.msra.mxu0 0
  %255 = vmatpush.bf16.msra.mxu0 0
  %256 = vmatpush.bf16.msra.mxu0 0
  %257 = vmatpush.bf16.msra.mxu0 0
  %258 = vmatpush.bf16.msra.mxu0 %v152
  %259 = vmatpush.bf16.msra.mxu0 %v151
  %260 = vmatmul.bf16.gmra.mxu0 %v157
  %v261 = vpop.f32.mrf.mxu0
  %v262 = vadd.f32 %v141, %v261
  %v263 = vpop.f32.mrf.mxu0
  %v264 = vadd.f32 %v141, %v263
  %265 = vmatmul.bf16.gmra.mxu0 %v160
  %v266 = vpop.f32.mrf.mxu0
  %v267 = vadd.f32 %v141, %v266
  %v268 = vpop.f32.mrf.mxu0
  %v269 = vadd.f32 %v141, %v268
  %270 = vmatmul.bf16.gmra.mxu0 %v163
  %v271 = vpop.f32.mrf.mxu0
  %v272 = vadd.f32 %v141, %v271
  %v273 = vpop.f32.mrf.mxu0
  %v274 = vadd.f32 %v141, %v273
  %275 = vmatmul.bf16.gmra.mxu0 %v166
  %v276 = vpop.f32.mrf.mxu0
  %v277 = vadd.f32 %v141, %v276
  %v278 = vpop.f32.mrf.mxu0
  %v279 = vadd.f32 %v141, %v278
  %280 = vmatmul.bf16.gmra.mxu0 %v169
  %v281 = vpop.f32.mrf.mxu0
  %v282 = vadd.f32 %v141, %v281
  %v283 = vpop.f32.mrf.mxu0
  %v284 = vadd.f32 %v141, %v283
  %285 = vmatmul.bf16.gmra.mxu0 %v172
  %v286 = vpop.f32.mrf.mxu0
  %v287 = vadd.f32 %v141, %v286
  %v288 = vpop.f32.mrf.mxu0
  %v289 = vadd.f32 %v141, %v288
  %290 = vmatmul.bf16.gmra.mxu0 %v175
  %v291 = vpop.f32.mrf.mxu0
  %v292 = vadd.f32 %v141, %v291
  %v293 = vpop.f32.mrf.mxu0
  %v294 = vadd.f32 %v141, %v293
  %295 = vmatmul.bf16.gmra.mxu0 %v178
  %v296 = vpop.f32.mrf.mxu0
  %v297 = vadd.f32 %v141, %v296
  %v298 = vpop.f32.mrf.mxu0
  %v299 = vadd.f32 %v141, %v298
  %300 = vmatmul.bf16.gmra.mxu0 %v181
  %v301 = vpop.f32.mrf.mxu0
  %v302 = vadd.f32 %v141, %v301
  %v303 = vpop.f32.mrf.mxu0
  %v304 = vadd.f32 %v141, %v303
  %305 = vmatmul.bf16.gmra.mxu0 %v184
  %v306 = vpop.f32.mrf.mxu0
  %v307 = vadd.f32 %v141, %v306
  %v308 = vpop.f32.mrf.mxu0
  %v309 = vadd.f32 %v141, %v308
  %310 = vmatmul.bf16.gmra.mxu0 %v187
  %v311 = vpop.f32.mrf.mxu0
  %v312 = vadd.f32 %v141, %v311
  %v313 = vpop.f32.mrf.mxu0
  %v314 = vadd.f32 %v141, %v313
  %315 = vmatmul.bf16.gmra.mxu0 %v190
  %v316 = vpop.f32.mrf.mxu0
  %v317 = vadd.f32 %v141, %v316
  %v318 = vpop.f32.mrf.mxu0
  %v319 = vadd.f32 %v141, %v318
  %320 = vmatmul.bf16.gmra.mxu0 %v193
  %v321 = vpop.f32.mrf.mxu0
  %v322 = vadd.f32 %v141, %v321
  %v323 = vpop.f32.mrf.mxu0
  %v324 = vadd.f32 %v141, %v323
  %325 = vmatmul.bf16.gmra.mxu0 %v196
  %v326 = vpop.f32.mrf.mxu0
  %v327 = vadd.f32 %v141, %v326
  %v328 = vpop.f32.mrf.mxu0
  %v329 = vadd.f32 %v141, %v328
  %330 = vmatmul.bf16.gmra.mxu0 %v199
  %v331 = vpop.f32.mrf.mxu0
  %v332 = vadd.f32 %v141, %v331
  %v333 = vpop.f32.mrf.mxu0
  %v334 = vadd.f32 %v141, %v333
  %335 = vmatmul.bf16.gmra.mxu0 %v202
  %v336 = vpop.f32.mrf.mxu0
  %v337 = vadd.f32 %v141, %v336
  %v338 = vpop.f32.mrf.mxu0
  %v339 = vadd.f32 %v141, %v338
  %340 = vmatmul.bf16.gmra.mxu0 %v205
  %v341 = vpop.f32.mrf.mxu0
  %v342 = vadd.f32 %v141, %v341
  %v343 = vpop.f32.mrf.mxu0
  %v344 = vadd.f32 %v141, %v343
  %345 = vmatmul.bf16.gmra.mxu0 %v208
  %v346 = vpop.f32.mrf.mxu0
  %v347 = vadd.f32 %v141, %v346
  %v348 = vpop.f32.mrf.mxu0
  %v349 = vadd.f32 %v141, %v348
  %350 = vmatmul.bf16.gmra.mxu0 %v211
  %v351 = vpop.f32.mrf.mxu0
  %v352 = vadd.f32 %v141, %v351
  %v353 = vpop.f32.mrf.mxu0
  %v354 = vadd.f32 %v141, %v353
  %355 = vmatmul.bf16.gmra.mxu0 %v214
  %v356 = vpop.f32.mrf.mxu0
  %v357 = vadd.f32 %v141, %v356
  %v358 = vpop.f32.mrf.mxu0
  %v359 = vadd.f32 %v141, %v358
  %360 = vmatmul.bf16.gmra.mxu0 %v217
  %v361 = vpop.f32.mrf.mxu0
  %v362 = vadd.f32 %v141, %v361
  %v363 = vpop.f32.mrf.mxu0
  %v364 = vadd.f32 %v141, %v363
  %365 = vmatmul.bf16.gmra.mxu0 %v220
  %v366 = vpop.f32.mrf.mxu0
  %v367 = vadd.f32 %v141, %v366
  %v368 = vpop.f32.mrf.mxu0
  %v369 = vadd.f32 %v141, %v368
  %370 = vmatmul.bf16.gmra.mxu0 %v223
  %v371 = vpop.f32.mrf.mxu0
  %v372 = vadd.f32 %v141, %v371
  %v373 = vpop.f32.mrf.mxu0
  %v374 = vadd.f32 %v141, %v373
  %375 = vmatmul.bf16.gmra.mxu0 %v226
  %v376 = vpop.f32.mrf.mxu0
  %v377 = vadd.f32 %v141, %v376
  %v378 = vpop.f32.mrf.mxu0
  %v379 = vadd.f32 %v141, %v378
  %380 = vmatmul.bf16.gmra.mxu0 %v229
  %v381 = vpop.f32.mrf.mxu0
  %v382 = vadd.f32 %v141, %v381
  %v383 = vpop.f32.mrf.mxu0
  %v384 = vadd.f32 %v141, %v383
  %385 = vmatmul.bf16.gmra.mxu0 %v232
  %v386 = vpop.f32.mrf.mxu0
  %v387 = vadd.f32 %v141, %v386
  %v388 = vpop.f32.mrf.mxu0
  %v389 = vadd.f32 %v141, %v388
  %390 = vmatmul.bf16.gmra.mxu0 %v235
  %v391 = vpop.f32.mrf.mxu0
  %v392 = vadd.f32 %v141, %v391
  %v393 = vpop.f32.mrf.mxu0
  %v394 = vadd.f32 %v141, %v393
  %395 = vmatmul.bf16.gmra.mxu0 %v238
  %v396 = vpop.f32.mrf.mxu0
  %v397 = vadd.f32 %v141, %v396
  %v398 = vpop.f32.mrf.mxu0
  %v399 = vadd.f32 %v141, %v398
  %400 = vmatmul.bf16.gmra.mxu0 %v241
  %v401 = vpop.f32.mrf.mxu0
  %v402 = vadd.f32 %v141, %v401
  %v403 = vpop.f32.mrf.mxu0
  %v404 = vadd.f32 %v141, %v403
  %405 = vmatmul.bf16.gmra.mxu0 %v244
  %v406 = vpop.f32.mrf.mxu0
  %v407 = vadd.f32 %v141, %v406
  %v408 = vpop.f32.mrf.mxu0
  %v409 = vadd.f32 %v141, %v408
  %410 = vmatmul.bf16.gmra.mxu0 %v247
  %v411 = vpop.f32.mrf.mxu0
  %v412 = vadd.f32 %v141, %v411
  %v413 = vpop.f32.mrf.mxu0
  %v414 = vadd.f32 %v141, %v413
  %415 = vmatmul.bf16.gmra.mxu0 %v250
  %v416 = vpop.f32.mrf.mxu0
  %v417 = vadd.f32 %v141, %v416
  %v418 = vpop.f32.mrf.mxu0
  %v419 = vadd.f32 %v141, %v418
  %420 = vdwg.mxu0
  %v421 = vpack.c.bf16 %v262, %v262
  %v422 = vpack.c.bf16 %v264, %v264
  %v423 = vpack.c.bf16 %v267, %v267
  %v424 = vpack.c.bf16 %v269, %v269
  %v425 = vpack.c.bf16 %v272, %v272
  %v426 = vpack.c.bf16 %v274, %v274
  %v427 = vpack.c.bf16 %v277, %v277
  %v428 = vpack.c.bf16 %v279, %v279
  %v429 = vpack.c.bf16 %v282, %v282
  %v430 = vpack.c.bf16 %v284, %v284
  %v431 = vpack.c.bf16 %v287, %v287
  %v432 = vpack.c.bf16 %v289, %v289
  %v433 = vpack.c.bf16 %v292, %v292
  %v434 = vpack.c.bf16 %v294, %v294
  %v435 = vpack.c.bf16 %v297, %v297
  %v436 = vpack.c.bf16 %v299, %v299
  %v437 = vpack.c.bf16 %v302, %v302
  %v438 = vpack.c.bf16 %v304, %v304
  %v439 = vpack.c.bf16 %v307, %v307
  %v440 = vpack.c.bf16 %v309, %v309
  %v441 = vpack.c.bf16 %v312, %v312
  %v442 = vpack.c.bf16 %v314, %v314
  %v443 = vpack.c.bf16 %v317, %v317
  %v444 = vpack.c.bf16 %v319, %v319
  %v445 = vpack.c.bf16 %v322, %v322
  %v446 = vpack.c.bf16 %v324, %v324
  %v447 = vpack.c.bf16 %v327, %v327
  %v448 = vpack.c.bf16 %v329, %v329
  %v449 = vpack.c.bf16 %v332, %v332
  %v450 = vpack.c.bf16 %v334, %v334
  %v451 = vpack.c.bf16 %v337, %v337
  %v452 = vpack.c.bf16 %v339, %v339
  %v453 = vpack.c.bf16 %v342, %v342
  %v454 = vpack.c.bf16 %v344, %v344
  %v455 = vpack.c.bf16 %v347, %v347
  %v456 = vpack.c.bf16 %v349, %v349
  %v457 = vpack.c.bf16 %v352, %v352
  %v458 = vpack.c.bf16 %v354, %v354
  %v459 = vpack.c.bf16 %v357, %v357
  %v460 = vpack.c.bf16 %v359, %v359
  %v461 = vpack.c.bf16 %v362, %v362
  %v462 = vpack.c.bf16 %v364, %v364
  %v463 = vpack.c.bf16 %v367, %v367
  %v464 = vpack.c.bf16 %v369, %v369
  %v465 = vpack.c.bf16 %v372, %v372
  %v466 = vpack.c.bf16 %v374, %v374
  %v467 = vpack.c.bf16 %v377, %v377
  %v468 = vpack.c.bf16 %v379, %v379
  %v469 = vpack.c.bf16 %v382, %v382
  %v470 = vpack.c.bf16 %v384, %v384
  %v471 = vpack.c.bf16 %v387, %v387
  %v472 = vpack.c.bf16 %v389, %v389
  %v473 = vpack.c.bf16 %v392, %v392
  %v474 = vpack.c.bf16 %v394, %v394
  %v475 = vpack.c.bf16 %v397, %v397
  %v476 = vpack.c.bf16 %v399, %v399
  %v477 = vpack.c.bf16 %v402, %v402
  %v478 = vpack.c.bf16 %v404, %v404
  %v479 = vpack.c.bf16 %v407, %v407
  %v480 = vpack.c.bf16 %v409, %v409
  %v481 = vpack.c.bf16 %v412, %v412
  %v482 = vpack.c.bf16 %v414, %v414
  %v483 = vpack.c.bf16 %v417, %v417
  %v484 = vpack.c.bf16 %v419, %v419
  %v485 = vunpack.c.l.bf16 %v421
  %v486 = vunpack.c.l.bf16 %v422
  %v487 = vunpack.c.l.bf16 %v423
  %v488 = vunpack.c.l.bf16 %v424
  %v489 = vunpack.c.l.bf16 %v425
  %v490 = vunpack.c.l.bf16 %v426
  %v491 = vunpack.c.l.bf16 %v427
  %v492 = vunpack.c.l.bf16 %v428
  %v493 = vunpack.c.l.bf16 %v429
  %v494 = vunpack.c.l.bf16 %v430
  %v495 = vunpack.c.l.bf16 %v431
  %v496 = vunpack.c.l.bf16 %v432
  %v497 = vunpack.c.l.bf16 %v433
  %v498 = vunpack.c.l.bf16 %v434
  %v499 = vunpack.c.l.bf16 %v435
  %v500 = vunpack.c.l.bf16 %v436
  %v501 = vunpack.c.l.bf16 %v437
  %v502 = vunpack.c.l.bf16 %v438
  %v503 = vunpack.c.l.bf16 %v439
  %v504 = vunpack.c.l.bf16 %v440
  %v505 = vunpack.c.l.bf16 %v441
  %v506 = vunpack.c.l.bf16 %v442
  %v507 = vunpack.c.l.bf16 %v443
  %v508 = vunpack.c.l.bf16 %v444
  %v509 = vunpack.c.l.bf16 %v445
  %v510 = vunpack.c.l.bf16 %v446
  %v511 = vunpack.c.l.bf16 %v447
  %v512 = vunpack.c.l.bf16 %v448
  %v513 = vunpack.c.l.bf16 %v449
  %v514 = vunpack.c.l.bf16 %v450
  %v515 = vunpack.c.l.bf16 %v451
  %v516 = vunpack.c.l.bf16 %v452
  %v517 = vunpack.c.l.bf16 %v453
  %v518 = vunpack.c.l.bf16 %v454
  %v519 = vunpack.c.l.bf16 %v455
  %v520 = vunpack.c.l.bf16 %v456
  %v521 = vunpack.c.l.bf16 %v457
  %v522 = vunpack.c.l.bf16 %v458
  %v523 = vunpack.c.l.bf16 %v459
  %v524 = vunpack.c.l.bf16 %v460
  %v525 = vunpack.c.l.bf16 %v461
  %v526 = vunpack.c.l.bf16 %v462
  %v527 = vunpack.c.l.bf16 %v463
  %v528 = vunpack.c.l.bf16 %v464
  %v529 = vunpack.c.l.bf16 %v465
  %v530 = vunpack.c.l.bf16 %v466
  %v531 = vunpack.c.l.bf16 %v467
  %v532 = vunpack.c.l.bf16 %v468
  %v533 = vunpack.c.l.bf16 %v469
  %v534 = vunpack.c.l.bf16 %v470
  %v535 = vunpack.c.l.bf16 %v471
  %v536 = vunpack.c.l.bf16 %v472
  %v537 = vunpack.c.l.bf16 %v473
  %v538 = vunpack.c.l.bf16 %v474
  %v539 = vunpack.c.l.bf16 %v475
  %v540 = vunpack.c.l.bf16 %v476
  %v541 = vunpack.c.l.bf16 %v477
  %v542 = vunpack.c.l.bf16 %v478
  %v543 = vunpack.c.l.bf16 %v479
  %v544 = vunpack.c.l.bf16 %v480
  %v545 = vunpack.c.l.bf16 %v481
  %v546 = vunpack.c.l.bf16 %v482
  %v547 = vunpack.c.l.bf16 %v483
  %v548 = vunpack.c.l.bf16 %v484
  %v549 = vmax.f32 %v485, 0.0
  %v550 = vmax.f32 %v486, 0.0
  %v551 = vmax.f32 %v487, 0.0
  %v552 = vmax.f32 %v488, 0.0
  %v553 = vmax.f32 %v489, 0.0
  %v554 = vmax.f32 %v490, 0.0
  %v555 = vmax.f32 %v491, 0.0
  %v556 = vmax.f32 %v492, 0.0
  %v557 = vmax.f32 %v493, 0.0
  %v558 = vmax.f32 %v494, 0.0
  %v559 = vmax.f32 %v495, 0.0
  %v560 = vmax.f32 %v496, 0.0
  %v561 = vmax.f32 %v497, 0.0
  %v562 = vmax.f32 %v498, 0.0
  %v563 = vmax.f32 %v499, 0.0
  %v564 = vmax.f32 %v500, 0.0
  %v565 = vmax.f32 %v501, 0.0
  %v566 = vmax.f32 %v502, 0.0
  %v567 = vmax.f32 %v503, 0.0
  %v568 = vmax.f32 %v504, 0.0
  %v569 = vmax.f32 %v505, 0.0
  %v570 = vmax.f32 %v506, 0.0
  %v571 = vmax.f32 %v507, 0.0
  %v572 = vmax.f32 %v508, 0.0
  %v573 = vmax.f32 %v509, 0.0
  %v574 = vmax.f32 %v510, 0.0
  %v575 = vmax.f32 %v511, 0.0
  %v576 = vmax.f32 %v512, 0.0
  %v577 = vmax.f32 %v513, 0.0
  %v578 = vmax.f32 %v514, 0.0
  %v579 = vmax.f32 %v515, 0.0
  %v580 = vmax.f32 %v516, 0.0
  %v581 = vmax.f32 %v517, 0.0
  %v582 = vmax.f32 %v518, 0.0
  %v583 = vmax.f32 %v519, 0.0
  %v584 = vmax.f32 %v520, 0.0
  %v585 = vmax.f32 %v521, 0.0
  %v586 = vmax.f32 %v522, 0.0
  %v587 = vmax.f32 %v523, 0.0
  %v588 = vmax.f32 %v524, 0.0
  %v589 = vmax.f32 %v525, 0.0
  %v590 = vmax.f32 %v526, 0.0
  %v591 = vmax.f32 %v527, 0.0
  %v592 = vmax.f32 %v528, 0.0
  %v593 = vmax.f32 %v529, 0.0
  %v594 = vmax.f32 %v530, 0.0
  %v595 = vmax.f32 %v531, 0.0
  %v596 = vmax.f32 %v532, 0.0
  %v597 = vmax.f32 %v533, 0.0
  %v598 = vmax.f32 %v534, 0.0
  %v599 = vmax.f32 %v535, 0.0
  %v600 = vmax.f32 %v536, 0.0
  %v601 = vmax.f32 %v537, 0.0
  %v602 = vmax.f32 %v538, 0.0
  %v603 = vmax.f32 %v539, 0.0
  %v604 = vmax.f32 %v540, 0.0
  %v605 = vmax.f32 %v541, 0.0
  %v606 = vmax.f32 %v542, 0.0
  %v607 = vmax.f32 %v543, 0.0
  %v608 = vmax.f32 %v544, 0.0
  %v609 = vmax.f32 %v545, 0.0
  %v610 = vmax.f32 %v546, 0.0
  %v611 = vmax.f32 %v547, 0.0
  %v612 = vmax.f32 %v548, 0.0
  %v613 = vpack.c.bf16 %v550, %v549
  %v614 = vpack.c.bf16 %v552, %v551
  %v615 = vpack.c.bf16 %v554, %v553
  %v616 = vpack.c.bf16 %v556, %v555
  %v617 = vpack.c.bf16 %v558, %v557
  %v618 = vpack.c.bf16 %v560, %v559
  %v619 = vpack.c.bf16 %v562, %v561
  %v620 = vpack.c.bf16 %v564, %v563
  %v621 = vpack.c.bf16 %v566, %v565
  %v622 = vpack.c.bf16 %v568, %v567
  %v623 = vpack.c.bf16 %v570, %v569
  %v624 = vpack.c.bf16 %v572, %v571
  %v625 = vpack.c.bf16 %v574, %v573
  %v626 = vpack.c.bf16 %v576, %v575
  %v627 = vpack.c.bf16 %v578, %v577
  %v628 = vpack.c.bf16 %v580, %v579
  %v629 = vpack.c.bf16 %v582, %v581
  %v630 = vpack.c.bf16 %v584, %v583
  %v631 = vpack.c.bf16 %v586, %v585
  %v632 = vpack.c.bf16 %v588, %v587
  %v633 = vpack.c.bf16 %v590, %v589
  %v634 = vpack.c.bf16 %v592, %v591
  %v635 = vpack.c.bf16 %v594, %v593
  %v636 = vpack.c.bf16 %v596, %v595
  %v637 = vpack.c.bf16 %v598, %v597
  %v638 = vpack.c.bf16 %v600, %v599
  %v639 = vpack.c.bf16 %v602, %v601
  %v640 = vpack.c.bf16 %v604, %v603
  %v641 = vpack.c.bf16 %v606, %v605
  %v642 = vpack.c.bf16 %v608, %v607
  %v643 = vpack.c.bf16 %v610, %v609
  %v644 = vpack.c.bf16 %v612, %v611
  %v645 = vld [vmem:[%s3] sm:$0xf]
  %v646 = vld [vmem:[%s3 + $0x4] sm:$0xf]
  %v647 = vld [vmem:[%s3 + $0x8] sm:$0xf]
  %v648 = vld [vmem:[%s3 + $0xc] sm:$0xf]
  %v649 = vld [vmem:[%s3 + $0x10] sm:$0xf]
  %v650 = vld [vmem:[%s3 + $0x14] sm:$0xf]
  %v651 = vld [vmem:[%s3 + $0x18] sm:$0xf]
  %v652 = vld [vmem:[%s3 + $0x1c] sm:$0xf]
  %v653 = vld [vmem:[%s4] sm:$0x1]
  %v655 = vperm.slane %v653, 0
  %v665 = vunpack.c.l.b16 %v645
  %v666 = vunpack.c.l.b16 %v646
  %v667 = vunpack.c.l.b16 %v647
  %v668 = vunpack.c.l.b16 %v648
  %v669 = vunpack.c.l.b16 %v649
  %v670 = vunpack.c.l.b16 %v650
  %v671 = vunpack.c.l.b16 %v651
  %v672 = vunpack.c.l.b16 %v652
  %v673 = vpack.c.b16 %v666, %v665
  %v674 = vpack.c.b16 %v668, %v667
  %v675 = vpack.c.b16 %v670, %v669
  %v676 = vpack.c.b16 %v672, %v671
  %vm681 = vcmask 523264
  %v683 = vsel %vm681, %v613, 0
  %v686 = vsel %vm681, %v614, 0
  %v689 = vsel %vm681, %v615, 0
  %v692 = vsel %vm681, %v616, 0
  %v695 = vsel %vm681, %v617, 0
  %v698 = vsel %vm681, %v618, 0
  %v701 = vsel %vm681, %v619, 0
  %v704 = vsel %vm681, %v620, 0
  %v707 = vsel %vm681, %v621, 0
  %v710 = vsel %vm681, %v622, 0
  %v713 = vsel %vm681, %v623, 0
  %v716 = vsel %vm681, %v624, 0
  %v719 = vsel %vm681, %v625, 0
  %v722 = vsel %vm681, %v626, 0
  %v725 = vsel %vm681, %v627, 0
  %v728 = vsel %vm681, %v628, 0
  %v731 = vsel %vm681, %v629, 0
  %v734 = vsel %vm681, %v630, 0
  %v737 = vsel %vm681, %v631, 0
  %v740 = vsel %vm681, %v632, 0
  %v743 = vsel %vm681, %v633, 0
  %v746 = vsel %vm681, %v634, 0
  %v749 = vsel %vm681, %v635, 0
  %v752 = vsel %vm681, %v636, 0
  %v755 = vsel %vm681, %v637, 0
  %v758 = vsel %vm681, %v638, 0
  %v761 = vsel %vm681, %v639, 0
  %v764 = vsel %vm681, %v640, 0
  %v767 = vsel %vm681, %v641, 0
  %v770 = vsel %vm681, %v642, 0
  %v773 = vsel %vm681, %v643, 0
  %v776 = vsel %vm681, %v644, 0
  %778 = vmatpush.bf16.msra.mxu0 0
  %779 = vmatpush.bf16.msra.mxu0 0
  %780 = vmatpush.bf16.msra.mxu0 0
  %781 = vmatpush.bf16.msra.mxu0 0
  %782 = vmatpush.bf16.msra.mxu0 %v676
  %783 = vmatpush.bf16.msra.mxu0 %v675
  %784 = vmatpush.bf16.msra.mxu0 %v674
  %785 = vmatpush.bf16.msra.mxu0 %v673
  %786 = vmatmul.bf16.gmra.mxu0 %v683
  %v787 = vpop.f32.mrf.mxu0
  %v788 = vadd.f32 %v655, %v787
  %v789 = vpop.f32.mrf.mxu0
  %v790 = vadd.f32 %v655, %v789
  %791 = vmatmul.bf16.gmra.mxu0 %v686
  %v792 = vpop.f32.mrf.mxu0
  %v793 = vadd.f32 %v655, %v792
  %v794 = vpop.f32.mrf.mxu0
  %v795 = vadd.f32 %v655, %v794
  %796 = vmatmul.bf16.gmra.mxu0 %v689
  %v797 = vpop.f32.mrf.mxu0
  %v798 = vadd.f32 %v655, %v797
  %v799 = vpop.f32.mrf.mxu0
  %v800 = vadd.f32 %v655, %v799
  %801 = vmatmul.bf16.gmra.mxu0 %v692
  %v802 = vpop.f32.mrf.mxu0
  %v803 = vadd.f32 %v655, %v802
  %v804 = vpop.f32.mrf.mxu0
  %v805 = vadd.f32 %v655, %v804
  %806 = vmatmul.bf16.gmra.mxu0 %v695
  %v807 = vpop.f32.mrf.mxu0
  %v808 = vadd.f32 %v655, %v807
  %v809 = vpop.f32.mrf.mxu0
  %v810 = vadd.f32 %v655, %v809
  %811 = vmatmul.bf16.gmra.mxu0 %v698
  %v812 = vpop.f32.mrf.mxu0
  %v813 = vadd.f32 %v655, %v812
  %v814 = vpop.f32.mrf.mxu0
  %v815 = vadd.f32 %v655, %v814
  %816 = vmatmul.bf16.gmra.mxu0 %v701
  %v817 = vpop.f32.mrf.mxu0
  %v818 = vadd.f32 %v655, %v817
  %v819 = vpop.f32.mrf.mxu0
  %v820 = vadd.f32 %v655, %v819
  %821 = vmatmul.bf16.gmra.mxu0 %v704
  %v822 = vpop.f32.mrf.mxu0
  %v823 = vadd.f32 %v655, %v822
  %v824 = vpop.f32.mrf.mxu0
  %v825 = vadd.f32 %v655, %v824
  %826 = vmatmul.bf16.gmra.mxu0 %v707
  %v827 = vpop.f32.mrf.mxu0
  %v828 = vadd.f32 %v655, %v827
  %v829 = vpop.f32.mrf.mxu0
  %v830 = vadd.f32 %v655, %v829
  %831 = vmatmul.bf16.gmra.mxu0 %v710
  %v832 = vpop.f32.mrf.mxu0
  %v833 = vadd.f32 %v655, %v832
  %v834 = vpop.f32.mrf.mxu0
  %v835 = vadd.f32 %v655, %v834
  %836 = vmatmul.bf16.gmra.mxu0 %v713
  %v837 = vpop.f32.mrf.mxu0
  %v838 = vadd.f32 %v655, %v837
  %v839 = vpop.f32.mrf.mxu0
  %v840 = vadd.f32 %v655, %v839
  %841 = vmatmul.bf16.gmra.mxu0 %v716
  %v842 = vpop.f32.mrf.mxu0
  %v843 = vadd.f32 %v655, %v842
  %v844 = vpop.f32.mrf.mxu0
  %v845 = vadd.f32 %v655, %v844
  %846 = vmatmul.bf16.gmra.mxu0 %v719
  %v847 = vpop.f32.mrf.mxu0
  %v848 = vadd.f32 %v655, %v847
  %v849 = vpop.f32.mrf.mxu0
  %v850 = vadd.f32 %v655, %v849
  %851 = vmatmul.bf16.gmra.mxu0 %v722
  %v852 = vpop.f32.mrf.mxu0
  %v853 = vadd.f32 %v655, %v852
  %v854 = vpop.f32.mrf.mxu0
  %v855 = vadd.f32 %v655, %v854
  %856 = vmatmul.bf16.gmra.mxu0 %v725
  %v857 = vpop.f32.mrf.mxu0
  %v858 = vadd.f32 %v655, %v857
  %v859 = vpop.f32.mrf.mxu0
  %v860 = vadd.f32 %v655, %v859
  %861 = vmatmul.bf16.gmra.mxu0 %v728
  %v862 = vpop.f32.mrf.mxu0
  %v863 = vadd.f32 %v655, %v862
  %v864 = vpop.f32.mrf.mxu0
  %v865 = vadd.f32 %v655, %v864
  %866 = vmatmul.bf16.gmra.mxu0 %v731
  %v867 = vpop.f32.mrf.mxu0
  %v868 = vadd.f32 %v655, %v867
  %v869 = vpop.f32.mrf.mxu0
  %v870 = vadd.f32 %v655, %v869
  %871 = vmatmul.bf16.gmra.mxu0 %v734
  %v872 = vpop.f32.mrf.mxu0
  %v873 = vadd.f32 %v655, %v872
  %v874 = vpop.f32.mrf.mxu0
  %v875 = vadd.f32 %v655, %v874
  %876 = vmatmul.bf16.gmra.mxu0 %v737
  %v877 = vpop.f32.mrf.mxu0
  %v878 = vadd.f32 %v655, %v877
  %v879 = vpop.f32.mrf.mxu0
  %v880 = vadd.f32 %v655, %v879
  %881 = vmatmul.bf16.gmra.mxu0 %v740
  %v882 = vpop.f32.mrf.mxu0
  %v883 = vadd.f32 %v655, %v882
  %v884 = vpop.f32.mrf.mxu0
  %v885 = vadd.f32 %v655, %v884
  %886 = vmatmul.bf16.gmra.mxu0 %v743
  %v887 = vpop.f32.mrf.mxu0
  %v888 = vadd.f32 %v655, %v887
  %v889 = vpop.f32.mrf.mxu0
  %v890 = vadd.f32 %v655, %v889
  %891 = vmatmul.bf16.gmra.mxu0 %v746
  %v892 = vpop.f32.mrf.mxu0
  %v893 = vadd.f32 %v655, %v892
  %v894 = vpop.f32.mrf.mxu0
  %v895 = vadd.f32 %v655, %v894
  %896 = vmatmul.bf16.gmra.mxu0 %v749
  %v897 = vpop.f32.mrf.mxu0
  %v898 = vadd.f32 %v655, %v897
  %v899 = vpop.f32.mrf.mxu0
  %v900 = vadd.f32 %v655, %v899
  %901 = vmatmul.bf16.gmra.mxu0 %v752
  %v902 = vpop.f32.mrf.mxu0
  %v903 = vadd.f32 %v655, %v902
  %v904 = vpop.f32.mrf.mxu0
  %v905 = vadd.f32 %v655, %v904
  %906 = vmatmul.bf16.gmra.mxu0 %v755
  %v907 = vpop.f32.mrf.mxu0
  %v908 = vadd.f32 %v655, %v907
  %v909 = vpop.f32.mrf.mxu0
  %v910 = vadd.f32 %v655, %v909
  %911 = vmatmul.bf16.gmra.mxu0 %v758
  %v912 = vpop.f32.mrf.mxu0
  %v913 = vadd.f32 %v655, %v912
  %v914 = vpop.f32.mrf.mxu0
  %v915 = vadd.f32 %v655, %v914
  %916 = vmatmul.bf16.gmra.mxu0 %v761
  %v917 = vpop.f32.mrf.mxu0
  %v918 = vadd.f32 %v655, %v917
  %v919 = vpop.f32.mrf.mxu0
  %v920 = vadd.f32 %v655, %v919
  %921 = vmatmul.bf16.gmra.mxu0 %v764
  %v922 = vpop.f32.mrf.mxu0
  %v923 = vadd.f32 %v655, %v922
  %v924 = vpop.f32.mrf.mxu0
  %v925 = vadd.f32 %v655, %v924
  %926 = vmatmul.bf16.gmra.mxu0 %v767
  %v927 = vpop.f32.mrf.mxu0
  %v928 = vadd.f32 %v655, %v927
  %v929 = vpop.f32.mrf.mxu0
  %v930 = vadd.f32 %v655, %v929
  %931 = vmatmul.bf16.gmra.mxu0 %v770
  %v932 = vpop.f32.mrf.mxu0
  %v933 = vadd.f32 %v655, %v932
  %v934 = vpop.f32.mrf.mxu0
  %v935 = vadd.f32 %v655, %v934
  %936 = vmatmul.bf16.gmra.mxu0 %v773
  %v937 = vpop.f32.mrf.mxu0
  %v938 = vadd.f32 %v655, %v937
  %v939 = vpop.f32.mrf.mxu0
  %v940 = vadd.f32 %v655, %v939
  %941 = vmatmul.bf16.gmra.mxu0 %v776
  %v942 = vpop.f32.mrf.mxu0
  %v943 = vadd.f32 %v655, %v942
  %v944 = vpop.f32.mrf.mxu0
  %v945 = vadd.f32 %v655, %v944
  %946 = vdwg.mxu0
  %v947 = vpack.c.bf16 %v788, %v788
  %v948 = vpack.c.bf16 %v790, %v790
  %v949 = vpack.c.bf16 %v793, %v793
  %v950 = vpack.c.bf16 %v795, %v795
  %v951 = vpack.c.bf16 %v798, %v798
  %v952 = vpack.c.bf16 %v800, %v800
  %v953 = vpack.c.bf16 %v803, %v803
  %v954 = vpack.c.bf16 %v805, %v805
  %v955 = vpack.c.bf16 %v808, %v808
  %v956 = vpack.c.bf16 %v810, %v810
  %v957 = vpack.c.bf16 %v813, %v813
  %v958 = vpack.c.bf16 %v815, %v815
  %v959 = vpack.c.bf16 %v818, %v818
  %v960 = vpack.c.bf16 %v820, %v820
  %v961 = vpack.c.bf16 %v823, %v823
  %v962 = vpack.c.bf16 %v825, %v825
  %v963 = vpack.c.bf16 %v828, %v828
  %v964 = vpack.c.bf16 %v830, %v830
  %v965 = vpack.c.bf16 %v833, %v833
  %v966 = vpack.c.bf16 %v835, %v835
  %v967 = vpack.c.bf16 %v838, %v838
  %v968 = vpack.c.bf16 %v840, %v840
  %v969 = vpack.c.bf16 %v843, %v843
  %v970 = vpack.c.bf16 %v845, %v845
  %v971 = vpack.c.bf16 %v848, %v848
  %v972 = vpack.c.bf16 %v850, %v850
  %v973 = vpack.c.bf16 %v853, %v853
  %v974 = vpack.c.bf16 %v855, %v855
  %v975 = vpack.c.bf16 %v858, %v858
  %v976 = vpack.c.bf16 %v860, %v860
  %v977 = vpack.c.bf16 %v863, %v863
  %v978 = vpack.c.bf16 %v865, %v865
  %v979 = vpack.c.bf16 %v868, %v868
  %v980 = vpack.c.bf16 %v870, %v870
  %v981 = vpack.c.bf16 %v873, %v873
  %v982 = vpack.c.bf16 %v875, %v875
  %v983 = vpack.c.bf16 %v878, %v878
  %v984 = vpack.c.bf16 %v880, %v880
  %v985 = vpack.c.bf16 %v883, %v883
  %v986 = vpack.c.bf16 %v885, %v885
  %v987 = vpack.c.bf16 %v888, %v888
  %v988 = vpack.c.bf16 %v890, %v890
  %v989 = vpack.c.bf16 %v893, %v893
  %v990 = vpack.c.bf16 %v895, %v895
  %v991 = vpack.c.bf16 %v898, %v898
  %v992 = vpack.c.bf16 %v900, %v900
  %v993 = vpack.c.bf16 %v903, %v903
  %v994 = vpack.c.bf16 %v905, %v905
  %v995 = vpack.c.bf16 %v908, %v908
  %v996 = vpack.c.bf16 %v910, %v910
  %v997 = vpack.c.bf16 %v913, %v913
  %v998 = vpack.c.bf16 %v915, %v915
  %v999 = vpack.c.bf16 %v918, %v918
  %v1000 = vpack.c.bf16 %v920, %v920
  %v1001 = vpack.c.bf16 %v923, %v923
  %v1002 = vpack.c.bf16 %v925, %v925
  %v1003 = vpack.c.bf16 %v928, %v928
  %v1004 = vpack.c.bf16 %v930, %v930
  %v1005 = vpack.c.bf16 %v933, %v933
  %v1006 = vpack.c.bf16 %v935, %v935
  %v1007 = vpack.c.bf16 %v938, %v938
  %v1008 = vpack.c.bf16 %v940, %v940
  %v1009 = vpack.c.bf16 %v943, %v943
  %v1010 = vpack.c.bf16 %v945, %v945
  %v1011 = vunpack.c.l.bf16 %v947
  %v1012 = vunpack.c.l.bf16 %v948
  %v1013 = vunpack.c.l.bf16 %v949
  %v1014 = vunpack.c.l.bf16 %v950
  %v1015 = vunpack.c.l.bf16 %v951
  %v1016 = vunpack.c.l.bf16 %v952
  %v1017 = vunpack.c.l.bf16 %v953
  %v1018 = vunpack.c.l.bf16 %v954
  %v1019 = vunpack.c.l.bf16 %v955
  %v1020 = vunpack.c.l.bf16 %v956
  %v1021 = vunpack.c.l.bf16 %v957
  %v1022 = vunpack.c.l.bf16 %v958
  %v1023 = vunpack.c.l.bf16 %v959
  %v1024 = vunpack.c.l.bf16 %v960
  %v1025 = vunpack.c.l.bf16 %v961
  %v1026 = vunpack.c.l.bf16 %v962
  %v1027 = vunpack.c.l.bf16 %v963
  %v1028 = vunpack.c.l.bf16 %v964
  %v1029 = vunpack.c.l.bf16 %v965
  %v1030 = vunpack.c.l.bf16 %v966
  %v1031 = vunpack.c.l.bf16 %v967
  %v1032 = vunpack.c.l.bf16 %v968
  %v1033 = vunpack.c.l.bf16 %v969
  %v1034 = vunpack.c.l.bf16 %v970
  %v1035 = vunpack.c.l.bf16 %v971
  %v1036 = vunpack.c.l.bf16 %v972
  %v1037 = vunpack.c.l.bf16 %v973
  %v1038 = vunpack.c.l.bf16 %v974
  %v1039 = vunpack.c.l.bf16 %v975
  %v1040 = vunpack.c.l.bf16 %v976
  %v1041 = vunpack.c.l.bf16 %v977
  %v1042 = vunpack.c.l.bf16 %v978
  %v1043 = vunpack.c.l.bf16 %v979
  %v1044 = vunpack.c.l.bf16 %v980
  %v1045 = vunpack.c.l.bf16 %v981
  %v1046 = vunpack.c.l.bf16 %v982
  %v1047 = vunpack.c.l.bf16 %v983
  %v1048 = vunpack.c.l.bf16 %v984
  %v1049 = vunpack.c.l.bf16 %v985
  %v1050 = vunpack.c.l.bf16 %v986
  %v1051 = vunpack.c.l.bf16 %v987
  %v1052 = vunpack.c.l.bf16 %v988
  %v1053 = vunpack.c.l.bf16 %v989
  %v1054 = vunpack.c.l.bf16 %v990
  %v1055 = vunpack.c.l.bf16 %v991
  %v1056 = vunpack.c.l.bf16 %v992
  %v1057 = vunpack.c.l.bf16 %v993
  %v1058 = vunpack.c.l.bf16 %v994
  %v1059 = vunpack.c.l.bf16 %v995
  %v1060 = vunpack.c.l.bf16 %v996
  %v1061 = vunpack.c.l.bf16 %v997
  %v1062 = vunpack.c.l.bf16 %v998
  %v1063 = vunpack.c.l.bf16 %v999
  %v1064 = vunpack.c.l.bf16 %v1000
  %v1065 = vunpack.c.l.bf16 %v1001
  %v1066 = vunpack.c.l.bf16 %v1002
  %v1067 = vunpack.c.l.bf16 %v1003
  %v1068 = vunpack.c.l.bf16 %v1004
  %v1069 = vunpack.c.l.bf16 %v1005
  %v1070 = vunpack.c.l.bf16 %v1006
  %v1071 = vunpack.c.l.bf16 %v1007
  %v1072 = vunpack.c.l.bf16 %v1008
  %v1073 = vunpack.c.l.bf16 %v1009
  %v1074 = vunpack.c.l.bf16 %v1010
  %v1075 = vmax.f32 %v1011, 0.0
  %v1076 = vmax.f32 %v1012, 0.0
  %v1077 = vmax.f32 %v1013, 0.0
  %v1078 = vmax.f32 %v1014, 0.0
  %v1079 = vmax.f32 %v1015, 0.0
  %v1080 = vmax.f32 %v1016, 0.0
  %v1081 = vmax.f32 %v1017, 0.0
  %v1082 = vmax.f32 %v1018, 0.0
  %v1083 = vmax.f32 %v1019, 0.0
  %v1084 = vmax.f32 %v1020, 0.0
  %v1085 = vmax.f32 %v1021, 0.0
  %v1086 = vmax.f32 %v1022, 0.0
  %v1087 = vmax.f32 %v1023, 0.0
  %v1088 = vmax.f32 %v1024, 0.0
  %v1089 = vmax.f32 %v1025, 0.0
  %v1090 = vmax.f32 %v1026, 0.0
  %v1091 = vmax.f32 %v1027, 0.0
  %v1092 = vmax.f32 %v1028, 0.0
  %v1093 = vmax.f32 %v1029, 0.0
  %v1094 = vmax.f32 %v1030, 0.0
  %v1095 = vmax.f32 %v1031, 0.0
  %v1096 = vmax.f32 %v1032, 0.0
  %v1097 = vmax.f32 %v1033, 0.0
  %v1098 = vmax.f32 %v1034, 0.0
  %v1099 = vmax.f32 %v1035, 0.0
  %v1100 = vmax.f32 %v1036, 0.0
  %v1101 = vmax.f32 %v1037, 0.0
  %v1102 = vmax.f32 %v1038, 0.0
  %v1103 = vmax.f32 %v1039, 0.0
  %v1104 = vmax.f32 %v1040, 0.0
  %v1105 = vmax.f32 %v1041, 0.0
  %v1106 = vmax.f32 %v1042, 0.0
  %v1107 = vmax.f32 %v1043, 0.0
  %v1108 = vmax.f32 %v1044, 0.0
  %v1109 = vmax.f32 %v1045, 0.0
  %v1110 = vmax.f32 %v1046, 0.0
  %v1111 = vmax.f32 %v1047, 0.0
  %v1112 = vmax.f32 %v1048, 0.0
  %v1113 = vmax.f32 %v1049, 0.0
  %v1114 = vmax.f32 %v1050, 0.0
  %v1115 = vmax.f32 %v1051, 0.0
  %v1116 = vmax.f32 %v1052, 0.0
  %v1117 = vmax.f32 %v1053, 0.0
  %v1118 = vmax.f32 %v1054, 0.0
  %v1119 = vmax.f32 %v1055, 0.0
  %v1120 = vmax.f32 %v1056, 0.0
  %v1121 = vmax.f32 %v1057, 0.0
  %v1122 = vmax.f32 %v1058, 0.0
  %v1123 = vmax.f32 %v1059, 0.0
  %v1124 = vmax.f32 %v1060, 0.0
  %v1125 = vmax.f32 %v1061, 0.0
  %v1126 = vmax.f32 %v1062, 0.0
  %v1127 = vmax.f32 %v1063, 0.0
  %v1128 = vmax.f32 %v1064, 0.0
  %v1129 = vmax.f32 %v1065, 0.0
  %v1130 = vmax.f32 %v1066, 0.0
  %v1131 = vmax.f32 %v1067, 0.0
  %v1132 = vmax.f32 %v1068, 0.0
  %v1133 = vmax.f32 %v1069, 0.0
  %v1134 = vmax.f32 %v1070, 0.0
  %v1135 = vmax.f32 %v1071, 0.0
  %v1136 = vmax.f32 %v1072, 0.0
  %v1137 = vmax.f32 %v1073, 0.0
  %v1138 = vmax.f32 %v1074, 0.0
  %v1139 = vpack.c.bf16 %v1076, %v1075
  %v1140 = vpack.c.bf16 %v1078, %v1077
  %v1141 = vpack.c.bf16 %v1080, %v1079
  %v1142 = vpack.c.bf16 %v1082, %v1081
  %v1143 = vpack.c.bf16 %v1084, %v1083
  %v1144 = vpack.c.bf16 %v1086, %v1085
  %v1145 = vpack.c.bf16 %v1088, %v1087
  %v1146 = vpack.c.bf16 %v1090, %v1089
  %v1147 = vpack.c.bf16 %v1092, %v1091
  %v1148 = vpack.c.bf16 %v1094, %v1093
  %v1149 = vpack.c.bf16 %v1096, %v1095
  %v1150 = vpack.c.bf16 %v1098, %v1097
  %v1151 = vpack.c.bf16 %v1100, %v1099
  %v1152 = vpack.c.bf16 %v1102, %v1101
  %v1153 = vpack.c.bf16 %v1104, %v1103
  %v1154 = vpack.c.bf16 %v1106, %v1105
  %v1155 = vpack.c.bf16 %v1108, %v1107
  %v1156 = vpack.c.bf16 %v1110, %v1109
  %v1157 = vpack.c.bf16 %v1112, %v1111
  %v1158 = vpack.c.bf16 %v1114, %v1113
  %v1159 = vpack.c.bf16 %v1116, %v1115
  %v1160 = vpack.c.bf16 %v1118, %v1117
  %v1161 = vpack.c.bf16 %v1120, %v1119
  %v1162 = vpack.c.bf16 %v1122, %v1121
  %v1163 = vpack.c.bf16 %v1124, %v1123
  %v1164 = vpack.c.bf16 %v1126, %v1125
  %v1165 = vpack.c.bf16 %v1128, %v1127
  %v1166 = vpack.c.bf16 %v1130, %v1129
  %v1167 = vpack.c.bf16 %v1132, %v1131
  %v1168 = vpack.c.bf16 %v1134, %v1133
  %v1169 = vpack.c.bf16 %v1136, %v1135
  %v1170 = vpack.c.bf16 %v1138, %v1137
  %v1171 = vld [vmem:[%s5] sm:$0xf]
  %v1172 = vld [vmem:[%s5 + $0x4] sm:$0xf]
  %v1173 = vld [vmem:[%s5 + $0x8] sm:$0xf]
  %v1174 = vld [vmem:[%s5 + $0xc] sm:$0xf]
  %v1175 = vld [vmem:[%s5 + $0x10] sm:$0xf]
  %v1176 = vld [vmem:[%s5 + $0x14] sm:$0xf]
  %v1177 = vld [vmem:[%s5 + $0x18] sm:$0xf]
  %v1178 = vld [vmem:[%s5 + $0x1c] sm:$0xf]
  %v1179 = vld [vmem:[%s6] sm:$0x1]
  %v1181 = vperm.slane %v1179, 0
  %v1191 = vunpack.c.l.b16 %v1171
  %v1192 = vunpack.c.l.b16 %v1172
  %v1193 = vunpack.c.l.b16 %v1173
  %v1194 = vunpack.c.l.b16 %v1174
  %v1195 = vunpack.c.l.b16 %v1175
  %v1196 = vunpack.c.l.b16 %v1176
  %v1197 = vunpack.c.l.b16 %v1177
  %v1198 = vunpack.c.l.b16 %v1178
  %v1199 = vpack.c.b16 %v1192, %v1191
  %v1200 = vpack.c.b16 %v1194, %v1193
  %v1201 = vpack.c.b16 %v1196, %v1195
  %v1202 = vpack.c.b16 %v1198, %v1197
  %v1208 = vsel %vm681, %v1139, 0
  %v1211 = vsel %vm681, %v1140, 0
  %v1214 = vsel %vm681, %v1141, 0
  %v1217 = vsel %vm681, %v1142, 0
  %v1220 = vsel %vm681, %v1143, 0
  %v1223 = vsel %vm681, %v1144, 0
  %v1226 = vsel %vm681, %v1145, 0
  %v1229 = vsel %vm681, %v1146, 0
  %v1232 = vsel %vm681, %v1147, 0
  %v1235 = vsel %vm681, %v1148, 0
  %v1238 = vsel %vm681, %v1149, 0
  %v1241 = vsel %vm681, %v1150, 0
  %v1244 = vsel %vm681, %v1151, 0
  %v1247 = vsel %vm681, %v1152, 0
  %v1250 = vsel %vm681, %v1153, 0
  %v1253 = vsel %vm681, %v1154, 0
  %v1256 = vsel %vm681, %v1155, 0
  %v1259 = vsel %vm681, %v1156, 0
  %v1262 = vsel %vm681, %v1157, 0
  %v1265 = vsel %vm681, %v1158, 0
  %v1268 = vsel %vm681, %v1159, 0
  %v1271 = vsel %vm681, %v1160, 0
  %v1274 = vsel %vm681, %v1161, 0
  %v1277 = vsel %vm681, %v1162, 0
  %v1280 = vsel %vm681, %v1163, 0
  %v1283 = vsel %vm681, %v1164, 0
  %v1286 = vsel %vm681, %v1165, 0
  %v1289 = vsel %vm681, %v1166, 0
  %v1292 = vsel %vm681, %v1167, 0
  %v1295 = vsel %vm681, %v1168, 0
  %v1298 = vsel %vm681, %v1169, 0
  %v1301 = vsel %vm681, %v1170, 0
  %1303 = vmatpush.bf16.msra.mxu0 0
  %1304 = vmatpush.bf16.msra.mxu0 0
  %1305 = vmatpush.bf16.msra.mxu0 0
  %1306 = vmatpush.bf16.msra.mxu0 0
  %1307 = vmatpush.bf16.msra.mxu0 %v1202
  %1308 = vmatpush.bf16.msra.mxu0 %v1201
  %1309 = vmatpush.bf16.msra.mxu0 %v1200
  %1310 = vmatpush.bf16.msra.mxu0 %v1199
  %1311 = vmatmul.bf16.gmra.mxu0 %v1208
  %v1312 = vpop.f32.mrf.mxu0
  %v1313 = vadd.f32 %v1181, %v1312
  %v1314 = vpop.f32.mrf.mxu0
  %v1315 = vadd.f32 %v1181, %v1314
  %1316 = vmatmul.bf16.gmra.mxu0 %v1211
  %v1317 = vpop.f32.mrf.mxu0
  %v1318 = vadd.f32 %v1181, %v1317
  %v1319 = vpop.f32.mrf.mxu0
  %v1320 = vadd.f32 %v1181, %v1319
  %1321 = vmatmul.bf16.gmra.mxu0 %v1214
  %v1322 = vpop.f32.mrf.mxu0
  %v1323 = vadd.f32 %v1181, %v1322
  %v1324 = vpop.f32.mrf.mxu0
  %v1325 = vadd.f32 %v1181, %v1324
  %1326 = vmatmul.bf16.gmra.mxu0 %v1217
  %v1327 = vpop.f32.mrf.mxu0
  %v1328 = vadd.f32 %v1181, %v1327
  %v1329 = vpop.f32.mrf.mxu0
  %v1330 = vadd.f32 %v1181, %v1329
  %1331 = vmatmul.bf16.gmra.mxu0 %v1220
  %v1332 = vpop.f32.mrf.mxu0
  %v1333 = vadd.f32 %v1181, %v1332
  %v1334 = vpop.f32.mrf.mxu0
  %v1335 = vadd.f32 %v1181, %v1334
  %1336 = vmatmul.bf16.gmra.mxu0 %v1223
  %v1337 = vpop.f32.mrf.mxu0
  %v1338 = vadd.f32 %v1181, %v1337
  %v1339 = vpop.f32.mrf.mxu0
  %v1340 = vadd.f32 %v1181, %v1339
  %1341 = vmatmul.bf16.gmra.mxu0 %v1226
  %v1342 = vpop.f32.mrf.mxu0
  %v1343 = vadd.f32 %v1181, %v1342
  %v1344 = vpop.f32.mrf.mxu0
  %v1345 = vadd.f32 %v1181, %v1344
  %1346 = vmatmul.bf16.gmra.mxu0 %v1229
  %v1347 = vpop.f32.mrf.mxu0
  %v1348 = vadd.f32 %v1181, %v1347
  %v1349 = vpop.f32.mrf.mxu0
  %v1350 = vadd.f32 %v1181, %v1349
  %1351 = vmatmul.bf16.gmra.mxu0 %v1232
  %v1352 = vpop.f32.mrf.mxu0
  %v1353 = vadd.f32 %v1181, %v1352
  %v1354 = vpop.f32.mrf.mxu0
  %v1355 = vadd.f32 %v1181, %v1354
  %1356 = vmatmul.bf16.gmra.mxu0 %v1235
  %v1357 = vpop.f32.mrf.mxu0
  %v1358 = vadd.f32 %v1181, %v1357
  %v1359 = vpop.f32.mrf.mxu0
  %v1360 = vadd.f32 %v1181, %v1359
  %1361 = vmatmul.bf16.gmra.mxu0 %v1238
  %v1362 = vpop.f32.mrf.mxu0
  %v1363 = vadd.f32 %v1181, %v1362
  %v1364 = vpop.f32.mrf.mxu0
  %v1365 = vadd.f32 %v1181, %v1364
  %1366 = vmatmul.bf16.gmra.mxu0 %v1241
  %v1367 = vpop.f32.mrf.mxu0
  %v1368 = vadd.f32 %v1181, %v1367
  %v1369 = vpop.f32.mrf.mxu0
  %v1370 = vadd.f32 %v1181, %v1369
  %1371 = vmatmul.bf16.gmra.mxu0 %v1244
  %v1372 = vpop.f32.mrf.mxu0
  %v1373 = vadd.f32 %v1181, %v1372
  %v1374 = vpop.f32.mrf.mxu0
  %v1375 = vadd.f32 %v1181, %v1374
  %1376 = vmatmul.bf16.gmra.mxu0 %v1247
  %v1377 = vpop.f32.mrf.mxu0
  %v1378 = vadd.f32 %v1181, %v1377
  %v1379 = vpop.f32.mrf.mxu0
  %v1380 = vadd.f32 %v1181, %v1379
  %1381 = vmatmul.bf16.gmra.mxu0 %v1250
  %v1382 = vpop.f32.mrf.mxu0
  %v1383 = vadd.f32 %v1181, %v1382
  %v1384 = vpop.f32.mrf.mxu0
  %v1385 = vadd.f32 %v1181, %v1384
  %1386 = vmatmul.bf16.gmra.mxu0 %v1253
  %v1387 = vpop.f32.mrf.mxu0
  %v1388 = vadd.f32 %v1181, %v1387
  %v1389 = vpop.f32.mrf.mxu0
  %v1390 = vadd.f32 %v1181, %v1389
  %1391 = vmatmul.bf16.gmra.mxu0 %v1256
  %v1392 = vpop.f32.mrf.mxu0
  %v1393 = vadd.f32 %v1181, %v1392
  %v1394 = vpop.f32.mrf.mxu0
  %v1395 = vadd.f32 %v1181, %v1394
  %1396 = vmatmul.bf16.gmra.mxu0 %v1259
  %v1397 = vpop.f32.mrf.mxu0
  %v1398 = vadd.f32 %v1181, %v1397
  %v1399 = vpop.f32.mrf.mxu0
  %v1400 = vadd.f32 %v1181, %v1399
  %1401 = vmatmul.bf16.gmra.mxu0 %v1262
  %v1402 = vpop.f32.mrf.mxu0
  %v1403 = vadd.f32 %v1181, %v1402
  %v1404 = vpop.f32.mrf.mxu0
  %v1405 = vadd.f32 %v1181, %v1404
  %1406 = vmatmul.bf16.gmra.mxu0 %v1265
  %v1407 = vpop.f32.mrf.mxu0
  %v1408 = vadd.f32 %v1181, %v1407
  %v1409 = vpop.f32.mrf.mxu0
  %v1410 = vadd.f32 %v1181, %v1409
  %1411 = vmatmul.bf16.gmra.mxu0 %v1268
  %v1412 = vpop.f32.mrf.mxu0
  %v1413 = vadd.f32 %v1181, %v1412
  %v1414 = vpop.f32.mrf.mxu0
  %v1415 = vadd.f32 %v1181, %v1414
  %1416 = vmatmul.bf16.gmra.mxu0 %v1271
  %v1417 = vpop.f32.mrf.mxu0
  %v1418 = vadd.f32 %v1181, %v1417
  %v1419 = vpop.f32.mrf.mxu0
  %v1420 = vadd.f32 %v1181, %v1419
  %1421 = vmatmul.bf16.gmra.mxu0 %v1274
  %v1422 = vpop.f32.mrf.mxu0
  %v1423 = vadd.f32 %v1181, %v1422
  %v1424 = vpop.f32.mrf.mxu0
  %v1425 = vadd.f32 %v1181, %v1424
  %1426 = vmatmul.bf16.gmra.mxu0 %v1277
  %v1427 = vpop.f32.mrf.mxu0
  %v1428 = vadd.f32 %v1181, %v1427
  %v1429 = vpop.f32.mrf.mxu0
  %v1430 = vadd.f32 %v1181, %v1429
  %1431 = vmatmul.bf16.gmra.mxu0 %v1280
  %v1432 = vpop.f32.mrf.mxu0
  %v1433 = vadd.f32 %v1181, %v1432
  %v1434 = vpop.f32.mrf.mxu0
  %v1435 = vadd.f32 %v1181, %v1434
  %1436 = vmatmul.bf16.gmra.mxu0 %v1283
  %v1437 = vpop.f32.mrf.mxu0
  %v1438 = vadd.f32 %v1181, %v1437
  %v1439 = vpop.f32.mrf.mxu0
  %v1440 = vadd.f32 %v1181, %v1439
  %1441 = vmatmul.bf16.gmra.mxu0 %v1286
  %v1442 = vpop.f32.mrf.mxu0
  %v1443 = vadd.f32 %v1181, %v1442
  %v1444 = vpop.f32.mrf.mxu0
  %v1445 = vadd.f32 %v1181, %v1444
  %1446 = vmatmul.bf16.gmra.mxu0 %v1289
  %v1447 = vpop.f32.mrf.mxu0
  %v1448 = vadd.f32 %v1181, %v1447
  %v1449 = vpop.f32.mrf.mxu0
  %v1450 = vadd.f32 %v1181, %v1449
  %1451 = vmatmul.bf16.gmra.mxu0 %v1292
  %v1452 = vpop.f32.mrf.mxu0
  %v1453 = vadd.f32 %v1181, %v1452
  %v1454 = vpop.f32.mrf.mxu0
  %v1455 = vadd.f32 %v1181, %v1454
  %1456 = vmatmul.bf16.gmra.mxu0 %v1295
  %v1457 = vpop.f32.mrf.mxu0
  %v1458 = vadd.f32 %v1181, %v1457
  %v1459 = vpop.f32.mrf.mxu0
  %v1460 = vadd.f32 %v1181, %v1459
  %1461 = vmatmul.bf16.gmra.mxu0 %v1298
  %v1462 = vpop.f32.mrf.mxu0
  %v1463 = vadd.f32 %v1181, %v1462
  %v1464 = vpop.f32.mrf.mxu0
  %v1465 = vadd.f32 %v1181, %v1464
  %1466 = vmatmul.bf16.gmra.mxu0 %v1301
  %v1467 = vpop.f32.mrf.mxu0
  %v1468 = vadd.f32 %v1181, %v1467
  %v1469 = vpop.f32.mrf.mxu0
  %v1470 = vadd.f32 %v1181, %v1469
  %1471 = vdwg.mxu0
  %v1472 = vpack.c.bf16 %v1313, %v1313
  %v1473 = vpack.c.bf16 %v1315, %v1315
  %v1474 = vpack.c.bf16 %v1318, %v1318
  %v1475 = vpack.c.bf16 %v1320, %v1320
  %v1476 = vpack.c.bf16 %v1323, %v1323
  %v1477 = vpack.c.bf16 %v1325, %v1325
  %v1478 = vpack.c.bf16 %v1328, %v1328
  %v1479 = vpack.c.bf16 %v1330, %v1330
  %v1480 = vpack.c.bf16 %v1333, %v1333
  %v1481 = vpack.c.bf16 %v1335, %v1335
  %v1482 = vpack.c.bf16 %v1338, %v1338
  %v1483 = vpack.c.bf16 %v1340, %v1340
  %v1484 = vpack.c.bf16 %v1343, %v1343
  %v1485 = vpack.c.bf16 %v1345, %v1345
  %v1486 = vpack.c.bf16 %v1348, %v1348
  %v1487 = vpack.c.bf16 %v1350, %v1350
  %v1488 = vpack.c.bf16 %v1353, %v1353
  %v1489 = vpack.c.bf16 %v1355, %v1355
  %v1490 = vpack.c.bf16 %v1358, %v1358
  %v1491 = vpack.c.bf16 %v1360, %v1360
  %v1492 = vpack.c.bf16 %v1363, %v1363
  %v1493 = vpack.c.bf16 %v1365, %v1365
  %v1494 = vpack.c.bf16 %v1368, %v1368
  %v1495 = vpack.c.bf16 %v1370, %v1370
  %v1496 = vpack.c.bf16 %v1373, %v1373
  %v1497 = vpack.c.bf16 %v1375, %v1375
  %v1498 = vpack.c.bf16 %v1378, %v1378
  %v1499 = vpack.c.bf16 %v1380, %v1380
  %v1500 = vpack.c.bf16 %v1383, %v1383
  %v1501 = vpack.c.bf16 %v1385, %v1385
  %v1502 = vpack.c.bf16 %v1388, %v1388
  %v1503 = vpack.c.bf16 %v1390, %v1390
  %v1504 = vpack.c.bf16 %v1393, %v1393
  %v1505 = vpack.c.bf16 %v1395, %v1395
  %v1506 = vpack.c.bf16 %v1398, %v1398
  %v1507 = vpack.c.bf16 %v1400, %v1400
  %v1508 = vpack.c.bf16 %v1403, %v1403
  %v1509 = vpack.c.bf16 %v1405, %v1405
  %v1510 = vpack.c.bf16 %v1408, %v1408
  %v1511 = vpack.c.bf16 %v1410, %v1410
  %v1512 = vpack.c.bf16 %v1413, %v1413
  %v1513 = vpack.c.bf16 %v1415, %v1415
  %v1514 = vpack.c.bf16 %v1418, %v1418
  %v1515 = vpack.c.bf16 %v1420, %v1420
  %v1516 = vpack.c.bf16 %v1423, %v1423
  %v1517 = vpack.c.bf16 %v1425, %v1425
  %v1518 = vpack.c.bf16 %v1428, %v1428
  %v1519 = vpack.c.bf16 %v1430, %v1430
  %v1520 = vpack.c.bf16 %v1433, %v1433
  %v1521 = vpack.c.bf16 %v1435, %v1435
  %v1522 = vpack.c.bf16 %v1438, %v1438
  %v1523 = vpack.c.bf16 %v1440, %v1440
  %v1524 = vpack.c.bf16 %v1443, %v1443
  %v1525 = vpack.c.bf16 %v1445, %v1445
  %v1526 = vpack.c.bf16 %v1448, %v1448
  %v1527 = vpack.c.bf16 %v1450, %v1450
  %v1528 = vpack.c.bf16 %v1453, %v1453
  %v1529 = vpack.c.bf16 %v1455, %v1455
  %v1530 = vpack.c.bf16 %v1458, %v1458
  %v1531 = vpack.c.bf16 %v1460, %v1460
  %v1532 = vpack.c.bf16 %v1463, %v1463
  %v1533 = vpack.c.bf16 %v1465, %v1465
  %v1534 = vpack.c.bf16 %v1468, %v1468
  %v1535 = vpack.c.bf16 %v1470, %v1470
  %v1536 = vunpack.c.l.bf16 %v1472
  %v1537 = vunpack.c.l.bf16 %v1473
  %v1538 = vunpack.c.l.bf16 %v1474
  %v1539 = vunpack.c.l.bf16 %v1475
  %v1540 = vunpack.c.l.bf16 %v1476
  %v1541 = vunpack.c.l.bf16 %v1477
  %v1542 = vunpack.c.l.bf16 %v1478
  %v1543 = vunpack.c.l.bf16 %v1479
  %v1544 = vunpack.c.l.bf16 %v1480
  %v1545 = vunpack.c.l.bf16 %v1481
  %v1546 = vunpack.c.l.bf16 %v1482
  %v1547 = vunpack.c.l.bf16 %v1483
  %v1548 = vunpack.c.l.bf16 %v1484
  %v1549 = vunpack.c.l.bf16 %v1485
  %v1550 = vunpack.c.l.bf16 %v1486
  %v1551 = vunpack.c.l.bf16 %v1487
  %v1552 = vunpack.c.l.bf16 %v1488
  %v1553 = vunpack.c.l.bf16 %v1489
  %v1554 = vunpack.c.l.bf16 %v1490
  %v1555 = vunpack.c.l.bf16 %v1491
  %v1556 = vunpack.c.l.bf16 %v1492
  %v1557 = vunpack.c.l.bf16 %v1493
  %v1558 = vunpack.c.l.bf16 %v1494
  %v1559 = vunpack.c.l.bf16 %v1495
  %v1560 = vunpack.c.l.bf16 %v1496
  %v1561 = vunpack.c.l.bf16 %v1497
  %v1562 = vunpack.c.l.bf16 %v1498
  %v1563 = vunpack.c.l.bf16 %v1499
  %v1564 = vunpack.c.l.bf16 %v1500
  %v1565 = vunpack.c.l.bf16 %v1501
  %v1566 = vunpack.c.l.bf16 %v1502
  %v1567 = vunpack.c.l.bf16 %v1503
  %v1568 = vunpack.c.l.bf16 %v1504
  %v1569 = vunpack.c.l.bf16 %v1505
  %v1570 = vunpack.c.l.bf16 %v1506
  %v1571 = vunpack.c.l.bf16 %v1507
  %v1572 = vunpack.c.l.bf16 %v1508
  %v1573 = vunpack.c.l.bf16 %v1509
  %v1574 = vunpack.c.l.bf16 %v1510
  %v1575 = vunpack.c.l.bf16 %v1511
  %v1576 = vunpack.c.l.bf16 %v1512
  %v1577 = vunpack.c.l.bf16 %v1513
  %v1578 = vunpack.c.l.bf16 %v1514
  %v1579 = vunpack.c.l.bf16 %v1515
  %v1580 = vunpack.c.l.bf16 %v1516
  %v1581 = vunpack.c.l.bf16 %v1517
  %v1582 = vunpack.c.l.bf16 %v1518
  %v1583 = vunpack.c.l.bf16 %v1519
  %v1584 = vunpack.c.l.bf16 %v1520
  %v1585 = vunpack.c.l.bf16 %v1521
  %v1586 = vunpack.c.l.bf16 %v1522
  %v1587 = vunpack.c.l.bf16 %v1523
  %v1588 = vunpack.c.l.bf16 %v1524
  %v1589 = vunpack.c.l.bf16 %v1525
  %v1590 = vunpack.c.l.bf16 %v1526
  %v1591 = vunpack.c.l.bf16 %v1527
  %v1592 = vunpack.c.l.bf16 %v1528
  %v1593 = vunpack.c.l.bf16 %v1529
  %v1594 = vunpack.c.l.bf16 %v1530
  %v1595 = vunpack.c.l.bf16 %v1531
  %v1596 = vunpack.c.l.bf16 %v1532
  %v1597 = vunpack.c.l.bf16 %v1533
  %v1598 = vunpack.c.l.bf16 %v1534
  %v1599 = vunpack.c.l.bf16 %v1535
  %v1600 = vmax.f32 %v1536, 0.0
  %v1601 = vmax.f32 %v1537, 0.0
  %v1602 = vmax.f32 %v1538, 0.0
  %v1603 = vmax.f32 %v1539, 0.0
  %v1604 = vmax.f32 %v1540, 0.0
  %v1605 = vmax.f32 %v1541, 0.0
  %v1606 = vmax.f32 %v1542, 0.0
  %v1607 = vmax.f32 %v1543, 0.0
  %v1608 = vmax.f32 %v1544, 0.0
  %v1609 = vmax.f32 %v1545, 0.0
  %v1610 = vmax.f32 %v1546, 0.0
  %v1611 = vmax.f32 %v1547, 0.0
  %v1612 = vmax.f32 %v1548, 0.0
  %v1613 = vmax.f32 %v1549, 0.0
  %v1614 = vmax.f32 %v1550, 0.0
  %v1615 = vmax.f32 %v1551, 0.0
  %v1616 = vmax.f32 %v1552, 0.0
  %v1617 = vmax.f32 %v1553, 0.0
  %v1618 = vmax.f32 %v1554, 0.0
  %v1619 = vmax.f32 %v1555, 0.0
  %v1620 = vmax.f32 %v1556, 0.0
  %v1621 = vmax.f32 %v1557, 0.0
  %v1622 = vmax.f32 %v1558, 0.0
  %v1623 = vmax.f32 %v1559, 0.0
  %v1624 = vmax.f32 %v1560, 0.0
  %v1625 = vmax.f32 %v1561, 0.0
  %v1626 = vmax.f32 %v1562, 0.0
  %v1627 = vmax.f32 %v1563, 0.0
  %v1628 = vmax.f32 %v1564, 0.0
  %v1629 = vmax.f32 %v1565, 0.0
  %v1630 = vmax.f32 %v1566, 0.0
  %v1631 = vmax.f32 %v1567, 0.0
  %v1632 = vmax.f32 %v1568, 0.0
  %v1633 = vmax.f32 %v1569, 0.0
  %v1634 = vmax.f32 %v1570, 0.0
  %v1635 = vmax.f32 %v1571, 0.0
  %v1636 = vmax.f32 %v1572, 0.0
  %v1637 = vmax.f32 %v1573, 0.0
  %v1638 = vmax.f32 %v1574, 0.0
  %v1639 = vmax.f32 %v1575, 0.0
  %v1640 = vmax.f32 %v1576, 0.0
  %v1641 = vmax.f32 %v1577, 0.0
  %v1642 = vmax.f32 %v1578, 0.0
  %v1643 = vmax.f32 %v1579, 0.0
  %v1644 = vmax.f32 %v1580, 0.0
  %v1645 = vmax.f32 %v1581, 0.0
  %v1646 = vmax.f32 %v1582, 0.0
  %v1647 = vmax.f32 %v1583, 0.0
  %v1648 = vmax.f32 %v1584, 0.0
  %v1649 = vmax.f32 %v1585, 0.0
  %v1650 = vmax.f32 %v1586, 0.0
  %v1651 = vmax.f32 %v1587, 0.0
  %v1652 = vmax.f32 %v1588, 0.0
  %v1653 = vmax.f32 %v1589, 0.0
  %v1654 = vmax.f32 %v1590, 0.0
  %v1655 = vmax.f32 %v1591, 0.0
  %v1656 = vmax.f32 %v1592, 0.0
  %v1657 = vmax.f32 %v1593, 0.0
  %v1658 = vmax.f32 %v1594, 0.0
  %v1659 = vmax.f32 %v1595, 0.0
  %v1660 = vmax.f32 %v1596, 0.0
  %v1661 = vmax.f32 %v1597, 0.0
  %v1662 = vmax.f32 %v1598, 0.0
  %v1663 = vmax.f32 %v1599, 0.0
  %v1664 = vpack.c.bf16 %v1601, %v1600
  %v1665 = vpack.c.bf16 %v1603, %v1602
  %v1666 = vpack.c.bf16 %v1605, %v1604
  %v1667 = vpack.c.bf16 %v1607, %v1606
  %v1668 = vpack.c.bf16 %v1609, %v1608
  %v1669 = vpack.c.bf16 %v1611, %v1610
  %v1670 = vpack.c.bf16 %v1613, %v1612
  %v1671 = vpack.c.bf16 %v1615, %v1614
  %v1672 = vpack.c.bf16 %v1617, %v1616
  %v1673 = vpack.c.bf16 %v1619, %v1618
  %v1674 = vpack.c.bf16 %v1621, %v1620
  %v1675 = vpack.c.bf16 %v1623, %v1622
  %v1676 = vpack.c.bf16 %v1625, %v1624
  %v1677 = vpack.c.bf16 %v1627, %v1626
  %v1678 = vpack.c.bf16 %v1629, %v1628
  %v1679 = vpack.c.bf16 %v1631, %v1630
  %v1680 = vpack.c.bf16 %v1633, %v1632
  %v1681 = vpack.c.bf16 %v1635, %v1634
  %v1682 = vpack.c.bf16 %v1637, %v1636
  %v1683 = vpack.c.bf16 %v1639, %v1638
  %v1684 = vpack.c.bf16 %v1641, %v1640
  %v1685 = vpack.c.bf16 %v1643, %v1642
  %v1686 = vpack.c.bf16 %v1645, %v1644
  %v1687 = vpack.c.bf16 %v1647, %v1646
  %v1688 = vpack.c.bf16 %v1649, %v1648
  %v1689 = vpack.c.bf16 %v1651, %v1650
  %v1690 = vpack.c.bf16 %v1653, %v1652
  %v1691 = vpack.c.bf16 %v1655, %v1654
  %v1692 = vpack.c.bf16 %v1657, %v1656
  %v1693 = vpack.c.bf16 %v1659, %v1658
  %v1694 = vpack.c.bf16 %v1661, %v1660
  %v1695 = vpack.c.bf16 %v1663, %v1662
  %v1696 = vld [vmem:[%s7] sm:$0xf]
  %v1697 = vld [vmem:[%s7 + $0x4] sm:$0xf]
  %v1698 = vld [vmem:[%s7 + $0x8] sm:$0xf]
  %v1699 = vld [vmem:[%s7 + $0xc] sm:$0xf]
  %v1700 = vld [vmem:[%s7 + $0x10] sm:$0xf]
  %v1701 = vld [vmem:[%s7 + $0x14] sm:$0xf]
  %v1702 = vld [vmem:[%s7 + $0x18] sm:$0xf]
  %v1703 = vld [vmem:[%s7 + $0x1c] sm:$0xf]
  %v1704 = vld [vmem:[%s8] sm:$0x1]
  %v1706 = vperm.slane %v1704, 0
  %v1716 = vunpack.c.l.b16 %v1696
  %v1717 = vunpack.c.l.b16 %v1697
  %v1718 = vunpack.c.l.b16 %v1698
  %v1719 = vunpack.c.l.b16 %v1699
  %v1720 = vunpack.c.l.b16 %v1700
  %v1721 = vunpack.c.l.b16 %v1701
  %v1722 = vunpack.c.l.b16 %v1702
  %v1723 = vunpack.c.l.b16 %v1703
  %v1724 = vpack.c.b16 %v1717, %v1716
  %v1725 = vpack.c.b16 %v1719, %v1718
  %v1726 = vpack.c.b16 %v1721, %v1720
  %v1727 = vpack.c.b16 %v1723, %v1722
  %v1733 = vsel %vm681, %v1664, 0
  %v1736 = vsel %vm681, %v1665, 0
  %v1739 = vsel %vm681, %v1666, 0
  %v1742 = vsel %vm681, %v1667, 0
  %v1745 = vsel %vm681, %v1668, 0
  %v1748 = vsel %vm681, %v1669, 0
  %v1751 = vsel %vm681, %v1670, 0
  %v1754 = vsel %vm681, %v1671, 0
  %v1757 = vsel %vm681, %v1672, 0
  %v1760 = vsel %vm681, %v1673, 0
  %v1763 = vsel %vm681, %v1674, 0
  %v1766 = vsel %vm681, %v1675, 0
  %v1769 = vsel %vm681, %v1676, 0
  %v1772 = vsel %vm681, %v1677, 0
  %v1775 = vsel %vm681, %v1678, 0
  %v1778 = vsel %vm681, %v1679, 0
  %v1781 = vsel %vm681, %v1680, 0
  %v1784 = vsel %vm681, %v1681, 0
  %v1787 = vsel %vm681, %v1682, 0
  %v1790 = vsel %vm681, %v1683, 0
  %v1793 = vsel %vm681, %v1684, 0
  %v1796 = vsel %vm681, %v1685, 0
  %v1799 = vsel %vm681, %v1686, 0
  %v1802 = vsel %vm681, %v1687, 0
  %v1805 = vsel %vm681, %v1688, 0
  %v1808 = vsel %vm681, %v1689, 0
  %v1811 = vsel %vm681, %v1690, 0
  %v1814 = vsel %vm681, %v1691, 0
  %v1817 = vsel %vm681, %v1692, 0
  %v1820 = vsel %vm681, %v1693, 0
  %v1823 = vsel %vm681, %v1694, 0
  %v1826 = vsel %vm681, %v1695, 0
  %1828 = vmatpush.bf16.msra.mxu0 0
  %1829 = vmatpush.bf16.msra.mxu0 0
  %1830 = vmatpush.bf16.msra.mxu0 0
  %1831 = vmatpush.bf16.msra.mxu0 0
  %1832 = vmatpush.bf16.msra.mxu0 %v1727
  %1833 = vmatpush.bf16.msra.mxu0 %v1726
  %1834 = vmatpush.bf16.msra.mxu0 %v1725
  %1835 = vmatpush.bf16.msra.mxu0 %v1724
  %1836 = vmatmul.bf16.gmra.mxu0 %v1733
  %v1837 = vpop.f32.mrf.mxu0
  %v1838 = vadd.f32 %v1706, %v1837
  %v1839 = vpop.f32.mrf.mxu0
  %v1840 = vadd.f32 %v1706, %v1839
  %1841 = vmatmul.bf16.gmra.mxu0 %v1736
  %v1842 = vpop.f32.mrf.mxu0
  %v1843 = vadd.f32 %v1706, %v1842
  %v1844 = vpop.f32.mrf.mxu0
  %v1845 = vadd.f32 %v1706, %v1844
  %1846 = vmatmul.bf16.gmra.mxu0 %v1739
  %v1847 = vpop.f32.mrf.mxu0
  %v1848 = vadd.f32 %v1706, %v1847
  %v1849 = vpop.f32.mrf.mxu0
  %v1850 = vadd.f32 %v1706, %v1849
  %1851 = vmatmul.bf16.gmra.mxu0 %v1742
  %v1852 = vpop.f32.mrf.mxu0
  %v1853 = vadd.f32 %v1706, %v1852
  %v1854 = vpop.f32.mrf.mxu0
  %v1855 = vadd.f32 %v1706, %v1854
  %1856 = vmatmul.bf16.gmra.mxu0 %v1745
  %v1857 = vpop.f32.mrf.mxu0
  %v1858 = vadd.f32 %v1706, %v1857
  %v1859 = vpop.f32.mrf.mxu0
  %v1860 = vadd.f32 %v1706, %v1859
  %1861 = vmatmul.bf16.gmra.mxu0 %v1748
  %v1862 = vpop.f32.mrf.mxu0
  %v1863 = vadd.f32 %v1706, %v1862
  %v1864 = vpop.f32.mrf.mxu0
  %v1865 = vadd.f32 %v1706, %v1864
  %1866 = vmatmul.bf16.gmra.mxu0 %v1751
  %v1867 = vpop.f32.mrf.mxu0
  %v1868 = vadd.f32 %v1706, %v1867
  %v1869 = vpop.f32.mrf.mxu0
  %v1870 = vadd.f32 %v1706, %v1869
  %1871 = vmatmul.bf16.gmra.mxu0 %v1754
  %v1872 = vpop.f32.mrf.mxu0
  %v1873 = vadd.f32 %v1706, %v1872
  %v1874 = vpop.f32.mrf.mxu0
  %v1875 = vadd.f32 %v1706, %v1874
  %1876 = vmatmul.bf16.gmra.mxu0 %v1757
  %v1877 = vpop.f32.mrf.mxu0
  %v1878 = vadd.f32 %v1706, %v1877
  %v1879 = vpop.f32.mrf.mxu0
  %v1880 = vadd.f32 %v1706, %v1879
  %1881 = vmatmul.bf16.gmra.mxu0 %v1760
  %v1882 = vpop.f32.mrf.mxu0
  %v1883 = vadd.f32 %v1706, %v1882
  %v1884 = vpop.f32.mrf.mxu0
  %v1885 = vadd.f32 %v1706, %v1884
  %1886 = vmatmul.bf16.gmra.mxu0 %v1763
  %v1887 = vpop.f32.mrf.mxu0
  %v1888 = vadd.f32 %v1706, %v1887
  %v1889 = vpop.f32.mrf.mxu0
  %v1890 = vadd.f32 %v1706, %v1889
  %1891 = vmatmul.bf16.gmra.mxu0 %v1766
  %v1892 = vpop.f32.mrf.mxu0
  %v1893 = vadd.f32 %v1706, %v1892
  %v1894 = vpop.f32.mrf.mxu0
  %v1895 = vadd.f32 %v1706, %v1894
  %1896 = vmatmul.bf16.gmra.mxu0 %v1769
  %v1897 = vpop.f32.mrf.mxu0
  %v1898 = vadd.f32 %v1706, %v1897
  %v1899 = vpop.f32.mrf.mxu0
  %v1900 = vadd.f32 %v1706, %v1899
  %1901 = vmatmul.bf16.gmra.mxu0 %v1772
  %v1902 = vpop.f32.mrf.mxu0
  %v1903 = vadd.f32 %v1706, %v1902
  %v1904 = vpop.f32.mrf.mxu0
  %v1905 = vadd.f32 %v1706, %v1904
  %1906 = vmatmul.bf16.gmra.mxu0 %v1775
  %v1907 = vpop.f32.mrf.mxu0
  %v1908 = vadd.f32 %v1706, %v1907
  %v1909 = vpop.f32.mrf.mxu0
  %v1910 = vadd.f32 %v1706, %v1909
  %1911 = vmatmul.bf16.gmra.mxu0 %v1778
  %v1912 = vpop.f32.mrf.mxu0
  %v1913 = vadd.f32 %v1706, %v1912
  %v1914 = vpop.f32.mrf.mxu0
  %v1915 = vadd.f32 %v1706, %v1914
  %1916 = vmatmul.bf16.gmra.mxu0 %v1781
  %v1917 = vpop.f32.mrf.mxu0
  %v1918 = vadd.f32 %v1706, %v1917
  %v1919 = vpop.f32.mrf.mxu0
  %v1920 = vadd.f32 %v1706, %v1919
  %1921 = vmatmul.bf16.gmra.mxu0 %v1784
  %v1922 = vpop.f32.mrf.mxu0
  %v1923 = vadd.f32 %v1706, %v1922
  %v1924 = vpop.f32.mrf.mxu0
  %v1925 = vadd.f32 %v1706, %v1924
  %1926 = vmatmul.bf16.gmra.mxu0 %v1787
  %v1927 = vpop.f32.mrf.mxu0
  %v1928 = vadd.f32 %v1706, %v1927
  %v1929 = vpop.f32.mrf.mxu0
  %v1930 = vadd.f32 %v1706, %v1929
  %1931 = vmatmul.bf16.gmra.mxu0 %v1790
  %v1932 = vpop.f32.mrf.mxu0
  %v1933 = vadd.f32 %v1706, %v1932
  %v1934 = vpop.f32.mrf.mxu0
  %v1935 = vadd.f32 %v1706, %v1934
  %1936 = vmatmul.bf16.gmra.mxu0 %v1793
  %v1937 = vpop.f32.mrf.mxu0
  %v1938 = vadd.f32 %v1706, %v1937
  %v1939 = vpop.f32.mrf.mxu0
  %v1940 = vadd.f32 %v1706, %v1939
  %1941 = vmatmul.bf16.gmra.mxu0 %v1796
  %v1942 = vpop.f32.mrf.mxu0
  %v1943 = vadd.f32 %v1706, %v1942
  %v1944 = vpop.f32.mrf.mxu0
  %v1945 = vadd.f32 %v1706, %v1944
  %1946 = vmatmul.bf16.gmra.mxu0 %v1799
  %v1947 = vpop.f32.mrf.mxu0
  %v1948 = vadd.f32 %v1706, %v1947
  %v1949 = vpop.f32.mrf.mxu0
  %v1950 = vadd.f32 %v1706, %v1949
  %1951 = vmatmul.bf16.gmra.mxu0 %v1802
  %v1952 = vpop.f32.mrf.mxu0
  %v1953 = vadd.f32 %v1706, %v1952
  %v1954 = vpop.f32.mrf.mxu0
  %v1955 = vadd.f32 %v1706, %v1954
  %1956 = vmatmul.bf16.gmra.mxu0 %v1805
  %v1957 = vpop.f32.mrf.mxu0
  %v1958 = vadd.f32 %v1706, %v1957
  %v1959 = vpop.f32.mrf.mxu0
  %v1960 = vadd.f32 %v1706, %v1959
  %1961 = vmatmul.bf16.gmra.mxu0 %v1808
  %v1962 = vpop.f32.mrf.mxu0
  %v1963 = vadd.f32 %v1706, %v1962
  %v1964 = vpop.f32.mrf.mxu0
  %v1965 = vadd.f32 %v1706, %v1964
  %1966 = vmatmul.bf16.gmra.mxu0 %v1811
  %v1967 = vpop.f32.mrf.mxu0
  %v1968 = vadd.f32 %v1706, %v1967
  %v1969 = vpop.f32.mrf.mxu0
  %v1970 = vadd.f32 %v1706, %v1969
  %1971 = vmatmul.bf16.gmra.mxu0 %v1814
  %v1972 = vpop.f32.mrf.mxu0
  %v1973 = vadd.f32 %v1706, %v1972
  %v1974 = vpop.f32.mrf.mxu0
  %v1975 = vadd.f32 %v1706, %v1974
  %1976 = vmatmul.bf16.gmra.mxu0 %v1817
  %v1977 = vpop.f32.mrf.mxu0
  %v1978 = vadd.f32 %v1706, %v1977
  %v1979 = vpop.f32.mrf.mxu0
  %v1980 = vadd.f32 %v1706, %v1979
  %1981 = vmatmul.bf16.gmra.mxu0 %v1820
  %v1982 = vpop.f32.mrf.mxu0
  %v1983 = vadd.f32 %v1706, %v1982
  %v1984 = vpop.f32.mrf.mxu0
  %v1985 = vadd.f32 %v1706, %v1984
  %1986 = vmatmul.bf16.gmra.mxu0 %v1823
  %v1987 = vpop.f32.mrf.mxu0
  %v1988 = vadd.f32 %v1706, %v1987
  %v1989 = vpop.f32.mrf.mxu0
  %v1990 = vadd.f32 %v1706, %v1989
  %1991 = vmatmul.bf16.gmra.mxu0 %v1826
  %v1992 = vpop.f32.mrf.mxu0
  %v1993 = vadd.f32 %v1706, %v1992
  %v1994 = vpop.f32.mrf.mxu0
  %v1995 = vadd.f32 %v1706, %v1994
  %1996 = vdwg.mxu0
  %v1997 = vpack.c.bf16 %v1838, %v1838
  %v1998 = vpack.c.bf16 %v1840, %v1840
  %v1999 = vpack.c.bf16 %v1843, %v1843
  %v2000 = vpack.c.bf16 %v1845, %v1845
  %v2001 = vpack.c.bf16 %v1848, %v1848
  %v2002 = vpack.c.bf16 %v1850, %v1850
  %v2003 = vpack.c.bf16 %v1853, %v1853
  %v2004 = vpack.c.bf16 %v1855, %v1855
  %v2005 = vpack.c.bf16 %v1858, %v1858
  %v2006 = vpack.c.bf16 %v1860, %v1860
  %v2007 = vpack.c.bf16 %v1863, %v1863
  %v2008 = vpack.c.bf16 %v1865, %v1865
  %v2009 = vpack.c.bf16 %v1868, %v1868
  %v2010 = vpack.c.bf16 %v1870, %v1870
  %v2011 = vpack.c.bf16 %v1873, %v1873
  %v2012 = vpack.c.bf16 %v1875, %v1875
  %v2013 = vpack.c.bf16 %v1878, %v1878
  %v2014 = vpack.c.bf16 %v1880, %v1880
  %v2015 = vpack.c.bf16 %v1883, %v1883
  %v2016 = vpack.c.bf16 %v1885, %v1885
  %v2017 = vpack.c.bf16 %v1888, %v1888
  %v2018 = vpack.c.bf16 %v1890, %v1890
  %v2019 = vpack.c.bf16 %v1893, %v1893
  %v2020 = vpack.c.bf16 %v1895, %v1895
  %v2021 = vpack.c.bf16 %v1898, %v1898
  %v2022 = vpack.c.bf16 %v1900, %v1900
  %v2023 = vpack.c.bf16 %v1903, %v1903
  %v2024 = vpack.c.bf16 %v1905, %v1905
  %v2025 = vpack.c.bf16 %v1908, %v1908
  %v2026 = vpack.c.bf16 %v1910, %v1910
  %v2027 = vpack.c.bf16 %v1913, %v1913
  %v2028 = vpack.c.bf16 %v1915, %v1915
  %v2029 = vpack.c.bf16 %v1918, %v1918
  %v2030 = vpack.c.bf16 %v1920, %v1920
  %v2031 = vpack.c.bf16 %v1923, %v1923
  %v2032 = vpack.c.bf16 %v1925, %v1925
  %v2033 = vpack.c.bf16 %v1928, %v1928
  %v2034 = vpack.c.bf16 %v1930, %v1930
  %v2035 = vpack.c.bf16 %v1933, %v1933
  %v2036 = vpack.c.bf16 %v1935, %v1935
  %v2037 = vpack.c.bf16 %v1938, %v1938
  %v2038 = vpack.c.bf16 %v1940, %v1940
  %v2039 = vpack.c.bf16 %v1943, %v1943
  %v2040 = vpack.c.bf16 %v1945, %v1945
  %v2041 = vpack.c.bf16 %v1948, %v1948
  %v2042 = vpack.c.bf16 %v1950, %v1950
  %v2043 = vpack.c.bf16 %v1953, %v1953
  %v2044 = vpack.c.bf16 %v1955, %v1955
  %v2045 = vpack.c.bf16 %v1958, %v1958
  %v2046 = vpack.c.bf16 %v1960, %v1960
  %v2047 = vpack.c.bf16 %v1963, %v1963
  %v2048 = vpack.c.bf16 %v1965, %v1965
  %v2049 = vpack.c.bf16 %v1968, %v1968
  %v2050 = vpack.c.bf16 %v1970, %v1970
  %v2051 = vpack.c.bf16 %v1973, %v1973
  %v2052 = vpack.c.bf16 %v1975, %v1975
  %v2053 = vpack.c.bf16 %v1978, %v1978
  %v2054 = vpack.c.bf16 %v1980, %v1980
  %v2055 = vpack.c.bf16 %v1983, %v1983
  %v2056 = vpack.c.bf16 %v1985, %v1985
  %v2057 = vpack.c.bf16 %v1988, %v1988
  %v2058 = vpack.c.bf16 %v1990, %v1990
  %v2059 = vpack.c.bf16 %v1993, %v1993
  %v2060 = vpack.c.bf16 %v1995, %v1995
  %v2061 = vunpack.c.l.bf16 %v1997
  %v2062 = vunpack.c.l.bf16 %v1998
  %v2063 = vunpack.c.l.bf16 %v1999
  %v2064 = vunpack.c.l.bf16 %v2000
  %v2065 = vunpack.c.l.bf16 %v2001
  %v2066 = vunpack.c.l.bf16 %v2002
  %v2067 = vunpack.c.l.bf16 %v2003
  %v2068 = vunpack.c.l.bf16 %v2004
  %v2069 = vunpack.c.l.bf16 %v2005
  %v2070 = vunpack.c.l.bf16 %v2006
  %v2071 = vunpack.c.l.bf16 %v2007
  %v2072 = vunpack.c.l.bf16 %v2008
  %v2073 = vunpack.c.l.bf16 %v2009
  %v2074 = vunpack.c.l.bf16 %v2010
  %v2075 = vunpack.c.l.bf16 %v2011
  %v2076 = vunpack.c.l.bf16 %v2012
  %v2077 = vunpack.c.l.bf16 %v2013
  %v2078 = vunpack.c.l.bf16 %v2014
  %v2079 = vunpack.c.l.bf16 %v2015
  %v2080 = vunpack.c.l.bf16 %v2016
  %v2081 = vunpack.c.l.bf16 %v2017
  %v2082 = vunpack.c.l.bf16 %v2018
  %v2083 = vunpack.c.l.bf16 %v2019
  %v2084 = vunpack.c.l.bf16 %v2020
  %v2085 = vunpack.c.l.bf16 %v2021
  %v2086 = vunpack.c.l.bf16 %v2022
  %v2087 = vunpack.c.l.bf16 %v2023
  %v2088 = vunpack.c.l.bf16 %v2024
  %v2089 = vunpack.c.l.bf16 %v2025
  %v2090 = vunpack.c.l.bf16 %v2026
  %v2091 = vunpack.c.l.bf16 %v2027
  %v2092 = vunpack.c.l.bf16 %v2028
  %v2093 = vunpack.c.l.bf16 %v2029
  %v2094 = vunpack.c.l.bf16 %v2030
  %v2095 = vunpack.c.l.bf16 %v2031
  %v2096 = vunpack.c.l.bf16 %v2032
  %v2097 = vunpack.c.l.bf16 %v2033
  %v2098 = vunpack.c.l.bf16 %v2034
  %v2099 = vunpack.c.l.bf16 %v2035
  %v2100 = vunpack.c.l.bf16 %v2036
  %v2101 = vunpack.c.l.bf16 %v2037
  %v2102 = vunpack.c.l.bf16 %v2038
  %v2103 = vunpack.c.l.bf16 %v2039
  %v2104 = vunpack.c.l.bf16 %v2040
  %v2105 = vunpack.c.l.bf16 %v2041
  %v2106 = vunpack.c.l.bf16 %v2042
  %v2107 = vunpack.c.l.bf16 %v2043
  %v2108 = vunpack.c.l.bf16 %v2044
  %v2109 = vunpack.c.l.bf16 %v2045
  %v2110 = vunpack.c.l.bf16 %v2046
  %v2111 = vunpack.c.l.bf16 %v2047
  %v2112 = vunpack.c.l.bf16 %v2048
  %v2113 = vunpack.c.l.bf16 %v2049
  %v2114 = vunpack.c.l.bf16 %v2050
  %v2115 = vunpack.c.l.bf16 %v2051
  %v2116 = vunpack.c.l.bf16 %v2052
  %v2117 = vunpack.c.l.bf16 %v2053
  %v2118 = vunpack.c.l.bf16 %v2054
  %v2119 = vunpack.c.l.bf16 %v2055
  %v2120 = vunpack.c.l.bf16 %v2056
  %v2121 = vunpack.c.l.bf16 %v2057
  %v2122 = vunpack.c.l.bf16 %v2058
  %v2123 = vunpack.c.l.bf16 %v2059
  %v2124 = vunpack.c.l.bf16 %v2060
  %v2125 = vmax.f32 %v2061, 0.0
  %v2126 = vmax.f32 %v2062, 0.0
  %v2127 = vmax.f32 %v2063, 0.0
  %v2128 = vmax.f32 %v2064, 0.0
  %v2129 = vmax.f32 %v2065, 0.0
  %v2130 = vmax.f32 %v2066, 0.0
  %v2131 = vmax.f32 %v2067, 0.0
  %v2132 = vmax.f32 %v2068, 0.0
  %v2133 = vmax.f32 %v2069, 0.0
  %v2134 = vmax.f32 %v2070, 0.0
  %v2135 = vmax.f32 %v2071, 0.0
  %v2136 = vmax.f32 %v2072, 0.0
  %v2137 = vmax.f32 %v2073, 0.0
  %v2138 = vmax.f32 %v2074, 0.0
  %v2139 = vmax.f32 %v2075, 0.0
  %v2140 = vmax.f32 %v2076, 0.0
  %v2141 = vmax.f32 %v2077, 0.0
  %v2142 = vmax.f32 %v2078, 0.0
  %v2143 = vmax.f32 %v2079, 0.0
  %v2144 = vmax.f32 %v2080, 0.0
  %v2145 = vmax.f32 %v2081, 0.0
  %v2146 = vmax.f32 %v2082, 0.0
  %v2147 = vmax.f32 %v2083, 0.0
  %v2148 = vmax.f32 %v2084, 0.0
  %v2149 = vmax.f32 %v2085, 0.0
  %v2150 = vmax.f32 %v2086, 0.0
  %v2151 = vmax.f32 %v2087, 0.0
  %v2152 = vmax.f32 %v2088, 0.0
  %v2153 = vmax.f32 %v2089, 0.0
  %v2154 = vmax.f32 %v2090, 0.0
  %v2155 = vmax.f32 %v2091, 0.0
  %v2156 = vmax.f32 %v2092, 0.0
  %v2157 = vmax.f32 %v2093, 0.0
  %v2158 = vmax.f32 %v2094, 0.0
  %v2159 = vmax.f32 %v2095, 0.0
  %v2160 = vmax.f32 %v2096, 0.0
  %v2161 = vmax.f32 %v2097, 0.0
  %v2162 = vmax.f32 %v2098, 0.0
  %v2163 = vmax.f32 %v2099, 0.0
  %v2164 = vmax.f32 %v2100, 0.0
  %v2165 = vmax.f32 %v2101, 0.0
  %v2166 = vmax.f32 %v2102, 0.0
  %v2167 = vmax.f32 %v2103, 0.0
  %v2168 = vmax.f32 %v2104, 0.0
  %v2169 = vmax.f32 %v2105, 0.0
  %v2170 = vmax.f32 %v2106, 0.0
  %v2171 = vmax.f32 %v2107, 0.0
  %v2172 = vmax.f32 %v2108, 0.0
  %v2173 = vmax.f32 %v2109, 0.0
  %v2174 = vmax.f32 %v2110, 0.0
  %v2175 = vmax.f32 %v2111, 0.0
  %v2176 = vmax.f32 %v2112, 0.0
  %v2177 = vmax.f32 %v2113, 0.0
  %v2178 = vmax.f32 %v2114, 0.0
  %v2179 = vmax.f32 %v2115, 0.0
  %v2180 = vmax.f32 %v2116, 0.0
  %v2181 = vmax.f32 %v2117, 0.0
  %v2182 = vmax.f32 %v2118, 0.0
  %v2183 = vmax.f32 %v2119, 0.0
  %v2184 = vmax.f32 %v2120, 0.0
  %v2185 = vmax.f32 %v2121, 0.0
  %v2186 = vmax.f32 %v2122, 0.0
  %v2187 = vmax.f32 %v2123, 0.0
  %v2188 = vmax.f32 %v2124, 0.0
  %v2189 = vpack.c.bf16 %v2126, %v2125
  %v2190 = vpack.c.bf16 %v2128, %v2127
  %v2191 = vpack.c.bf16 %v2130, %v2129
  %v2192 = vpack.c.bf16 %v2132, %v2131
  %v2193 = vpack.c.bf16 %v2134, %v2133
  %v2194 = vpack.c.bf16 %v2136, %v2135
  %v2195 = vpack.c.bf16 %v2138, %v2137
  %v2196 = vpack.c.bf16 %v2140, %v2139
  %v2197 = vpack.c.bf16 %v2142, %v2141
  %v2198 = vpack.c.bf16 %v2144, %v2143
  %v2199 = vpack.c.bf16 %v2146, %v2145
  %v2200 = vpack.c.bf16 %v2148, %v2147
  %v2201 = vpack.c.bf16 %v2150, %v2149
  %v2202 = vpack.c.bf16 %v2152, %v2151
  %v2203 = vpack.c.bf16 %v2154, %v2153
  %v2204 = vpack.c.bf16 %v2156, %v2155
  %v2205 = vpack.c.bf16 %v2158, %v2157
  %v2206 = vpack.c.bf16 %v2160, %v2159
  %v2207 = vpack.c.bf16 %v2162, %v2161
  %v2208 = vpack.c.bf16 %v2164, %v2163
  %v2209 = vpack.c.bf16 %v2166, %v2165
  %v2210 = vpack.c.bf16 %v2168, %v2167
  %v2211 = vpack.c.bf16 %v2170, %v2169
  %v2212 = vpack.c.bf16 %v2172, %v2171
  %v2213 = vpack.c.bf16 %v2174, %v2173
  %v2214 = vpack.c.bf16 %v2176, %v2175
  %v2215 = vpack.c.bf16 %v2178, %v2177
  %v2216 = vpack.c.bf16 %v2180, %v2179
  %v2217 = vpack.c.bf16 %v2182, %v2181
  %v2218 = vpack.c.bf16 %v2184, %v2183
  %v2219 = vpack.c.bf16 %v2186, %v2185
  %v2220 = vpack.c.bf16 %v2188, %v2187
  %v2221 = vld [vmem:[%s9] sm:$0xf]
  %v2222 = vld [vmem:[%s9 + $0x4] sm:$0xf]
  %v2223 = vld [vmem:[%s9 + $0x8] sm:$0xf]
  %v2224 = vld [vmem:[%s9 + $0xc] sm:$0xf]
  %v2225 = vld [vmem:[%s10] sm:$0x1]
  %v2227 = vperm.slane %v2225, 0
  %v2233 = vunpack.c.l.b16 %v2221
  %v2234 = vunpack.c.l.b16 %v2222
  %v2235 = vunpack.c.l.b16 %v2223
  %v2236 = vunpack.c.l.b16 %v2224
  %v2237 = vpack.c.b16 %v2234, %v2233
  %v2238 = vpack.c.b16 %v2236, %v2235
  %v2242 = vsel %vm155, %v2189, 0
  %v2245 = vsel %vm155, %v2190, 0
  %v2248 = vsel %vm155, %v2191, 0
  %v2251 = vsel %vm155, %v2192, 0
  %v2254 = vsel %vm155, %v2193, 0
  %v2257 = vsel %vm155, %v2194, 0
  %v2260 = vsel %vm155, %v2195, 0
  %v2263 = vsel %vm155, %v2196, 0
  %v2266 = vsel %vm155, %v2197, 0
  %v2269 = vsel %vm155, %v2198, 0
  %v2272 = vsel %vm155, %v2199, 0
  %v2275 = vsel %vm155, %v2200, 0
  %v2278 = vsel %vm155, %v2201, 0
  %v2281 = vsel %vm155, %v2202, 0
  %v2284 = vsel %vm155, %v2203, 0
  %v2287 = vsel %vm155, %v2204, 0
  %v2290 = vsel %vm155, %v2205, 0
  %v2293 = vsel %vm155, %v2206, 0
  %v2296 = vsel %vm155, %v2207, 0
  %v2299 = vsel %vm155, %v2208, 0
  %v2302 = vsel %vm155, %v2209, 0
  %v2305 = vsel %vm155, %v2210, 0
  %v2308 = vsel %vm155, %v2211, 0
  %v2311 = vsel %vm155, %v2212, 0
  %v2314 = vsel %vm155, %v2213, 0
  %v2317 = vsel %vm155, %v2214, 0
  %v2320 = vsel %vm155, %v2215, 0
  %v2323 = vsel %vm155, %v2216, 0
  %v2326 = vsel %vm155, %v2217, 0
  %v2329 = vsel %vm155, %v2218, 0
  %v2332 = vsel %vm155, %v2219, 0
  %v2335 = vsel %vm155, %v2220, 0
  %2337 = vmatpush.bf16.msra.mxu0 0
  %2338 = vmatpush.bf16.msra.mxu0 0
  %2339 = vmatpush.bf16.msra.mxu0 0
  %2340 = vmatpush.bf16.msra.mxu0 0
  %2341 = vmatpush.bf16.msra.mxu0 0
  %2342 = vmatpush.bf16.msra.mxu0 0
  %2343 = vmatpush.bf16.msra.mxu0 %v2238
  %2344 = vmatpush.bf16.msra.mxu0 %v2237
  %2345 = vmatmul.bf16.gmra.mxu0 %v2242
  %v2346 = vpop.f32.mrf.mxu0
  %v2347 = vadd.f32 %v2227, %v2346
  %v2348 = vpop.f32.mrf.mxu0
  %v2349 = vadd.f32 %v2227, %v2348
  %2350 = vmatmul.bf16.gmra.mxu0 %v2245
  %v2351 = vpop.f32.mrf.mxu0
  %v2352 = vadd.f32 %v2227, %v2351
  %v2353 = vpop.f32.mrf.mxu0
  %v2354 = vadd.f32 %v2227, %v2353
  %2355 = vmatmul.bf16.gmra.mxu0 %v2248
  %v2356 = vpop.f32.mrf.mxu0
  %v2357 = vadd.f32 %v2227, %v2356
  %v2358 = vpop.f32.mrf.mxu0
  %v2359 = vadd.f32 %v2227, %v2358
  %2360 = vmatmul.bf16.gmra.mxu0 %v2251
  %v2361 = vpop.f32.mrf.mxu0
  %v2362 = vadd.f32 %v2227, %v2361
  %v2363 = vpop.f32.mrf.mxu0
  %v2364 = vadd.f32 %v2227, %v2363
  %2365 = vmatmul.bf16.gmra.mxu0 %v2254
  %v2366 = vpop.f32.mrf.mxu0
  %v2367 = vadd.f32 %v2227, %v2366
  %v2368 = vpop.f32.mrf.mxu0
  %v2369 = vadd.f32 %v2227, %v2368
  %2370 = vmatmul.bf16.gmra.mxu0 %v2257
  %v2371 = vpop.f32.mrf.mxu0
  %v2372 = vadd.f32 %v2227, %v2371
  %v2373 = vpop.f32.mrf.mxu0
  %v2374 = vadd.f32 %v2227, %v2373
  %2375 = vmatmul.bf16.gmra.mxu0 %v2260
  %v2376 = vpop.f32.mrf.mxu0
  %v2377 = vadd.f32 %v2227, %v2376
  %v2378 = vpop.f32.mrf.mxu0
  %v2379 = vadd.f32 %v2227, %v2378
  %2380 = vmatmul.bf16.gmra.mxu0 %v2263
  %v2381 = vpop.f32.mrf.mxu0
  %v2382 = vadd.f32 %v2227, %v2381
  %v2383 = vpop.f32.mrf.mxu0
  %v2384 = vadd.f32 %v2227, %v2383
  %2385 = vmatmul.bf16.gmra.mxu0 %v2266
  %v2386 = vpop.f32.mrf.mxu0
  %v2387 = vadd.f32 %v2227, %v2386
  %v2388 = vpop.f32.mrf.mxu0
  %v2389 = vadd.f32 %v2227, %v2388
  %2390 = vmatmul.bf16.gmra.mxu0 %v2269
  %v2391 = vpop.f32.mrf.mxu0
  %v2392 = vadd.f32 %v2227, %v2391
  %v2393 = vpop.f32.mrf.mxu0
  %v2394 = vadd.f32 %v2227, %v2393
  %2395 = vmatmul.bf16.gmra.mxu0 %v2272
  %v2396 = vpop.f32.mrf.mxu0
  %v2397 = vadd.f32 %v2227, %v2396
  %v2398 = vpop.f32.mrf.mxu0
  %v2399 = vadd.f32 %v2227, %v2398
  %2400 = vmatmul.bf16.gmra.mxu0 %v2275
  %v2401 = vpop.f32.mrf.mxu0
  %v2402 = vadd.f32 %v2227, %v2401
  %v2403 = vpop.f32.mrf.mxu0
  %v2404 = vadd.f32 %v2227, %v2403
  %2405 = vmatmul.bf16.gmra.mxu0 %v2278
  %v2406 = vpop.f32.mrf.mxu0
  %v2407 = vadd.f32 %v2227, %v2406
  %v2408 = vpop.f32.mrf.mxu0
  %v2409 = vadd.f32 %v2227, %v2408
  %2410 = vmatmul.bf16.gmra.mxu0 %v2281
  %v2411 = vpop.f32.mrf.mxu0
  %v2412 = vadd.f32 %v2227, %v2411
  %v2413 = vpop.f32.mrf.mxu0
  %v2414 = vadd.f32 %v2227, %v2413
  %2415 = vmatmul.bf16.gmra.mxu0 %v2284
  %v2416 = vpop.f32.mrf.mxu0
  %v2417 = vadd.f32 %v2227, %v2416
  %v2418 = vpop.f32.mrf.mxu0
  %v2419 = vadd.f32 %v2227, %v2418
  %2420 = vmatmul.bf16.gmra.mxu0 %v2287
  %v2421 = vpop.f32.mrf.mxu0
  %v2422 = vadd.f32 %v2227, %v2421
  %v2423 = vpop.f32.mrf.mxu0
  %v2424 = vadd.f32 %v2227, %v2423
  %2425 = vmatmul.bf16.gmra.mxu0 %v2290
  %v2426 = vpop.f32.mrf.mxu0
  %v2427 = vadd.f32 %v2227, %v2426
  %v2428 = vpop.f32.mrf.mxu0
  %v2429 = vadd.f32 %v2227, %v2428
  %2430 = vmatmul.bf16.gmra.mxu0 %v2293
  %v2431 = vpop.f32.mrf.mxu0
  %v2432 = vadd.f32 %v2227, %v2431
  %v2433 = vpop.f32.mrf.mxu0
  %v2434 = vadd.f32 %v2227, %v2433
  %2435 = vmatmul.bf16.gmra.mxu0 %v2296
  %v2436 = vpop.f32.mrf.mxu0
  %v2437 = vadd.f32 %v2227, %v2436
  %v2438 = vpop.f32.mrf.mxu0
  %v2439 = vadd.f32 %v2227, %v2438
  %2440 = vmatmul.bf16.gmra.mxu0 %v2299
  %v2441 = vpop.f32.mrf.mxu0
  %v2442 = vadd.f32 %v2227, %v2441
  %v2443 = vpop.f32.mrf.mxu0
  %v2444 = vadd.f32 %v2227, %v2443
  %2445 = vmatmul.bf16.gmra.mxu0 %v2302
  %v2446 = vpop.f32.mrf.mxu0
  %v2447 = vadd.f32 %v2227, %v2446
  %v2448 = vpop.f32.mrf.mxu0
  %v2449 = vadd.f32 %v2227, %v2448
  %2450 = vmatmul.bf16.gmra.mxu0 %v2305
  %v2451 = vpop.f32.mrf.mxu0
  %v2452 = vadd.f32 %v2227, %v2451
  %v2453 = vpop.f32.mrf.mxu0
  %v2454 = vadd.f32 %v2227, %v2453
  %2455 = vmatmul.bf16.gmra.mxu0 %v2308
  %v2456 = vpop.f32.mrf.mxu0
  %v2457 = vadd.f32 %v2227, %v2456
  %v2458 = vpop.f32.mrf.mxu0
  %v2459 = vadd.f32 %v2227, %v2458
  %2460 = vmatmul.bf16.gmra.mxu0 %v2311
  %v2461 = vpop.f32.mrf.mxu0
  %v2462 = vadd.f32 %v2227, %v2461
  %v2463 = vpop.f32.mrf.mxu0
  %v2464 = vadd.f32 %v2227, %v2463
  %2465 = vmatmul.bf16.gmra.mxu0 %v2314
  %v2466 = vpop.f32.mrf.mxu0
  %v2467 = vadd.f32 %v2227, %v2466
  %v2468 = vpop.f32.mrf.mxu0
  %v2469 = vadd.f32 %v2227, %v2468
  %2470 = vmatmul.bf16.gmra.mxu0 %v2317
  %v2471 = vpop.f32.mrf.mxu0
  %v2472 = vadd.f32 %v2227, %v2471
  %v2473 = vpop.f32.mrf.mxu0
  %v2474 = vadd.f32 %v2227, %v2473
  %2475 = vmatmul.bf16.gmra.mxu0 %v2320
  %v2476 = vpop.f32.mrf.mxu0
  %v2477 = vadd.f32 %v2227, %v2476
  %v2478 = vpop.f32.mrf.mxu0
  %v2479 = vadd.f32 %v2227, %v2478
  %2480 = vmatmul.bf16.gmra.mxu0 %v2323
  %v2481 = vpop.f32.mrf.mxu0
  %v2482 = vadd.f32 %v2227, %v2481
  %v2483 = vpop.f32.mrf.mxu0
  %v2484 = vadd.f32 %v2227, %v2483
  %2485 = vmatmul.bf16.gmra.mxu0 %v2326
  %v2486 = vpop.f32.mrf.mxu0
  %v2487 = vadd.f32 %v2227, %v2486
  %v2488 = vpop.f32.mrf.mxu0
  %v2489 = vadd.f32 %v2227, %v2488
  %2490 = vmatmul.bf16.gmra.mxu0 %v2329
  %v2491 = vpop.f32.mrf.mxu0
  %v2492 = vadd.f32 %v2227, %v2491
  %v2493 = vpop.f32.mrf.mxu0
  %v2494 = vadd.f32 %v2227, %v2493
  %2495 = vmatmul.bf16.gmra.mxu0 %v2332
  %v2496 = vpop.f32.mrf.mxu0
  %v2497 = vadd.f32 %v2227, %v2496
  %v2498 = vpop.f32.mrf.mxu0
  %v2499 = vadd.f32 %v2227, %v2498
  %2500 = vmatmul.bf16.gmra.mxu0 %v2335
  %v2501 = vpop.f32.mrf.mxu0
  %v2502 = vadd.f32 %v2227, %v2501
  %v2503 = vpop.f32.mrf.mxu0
  %v2504 = vadd.f32 %v2227, %v2503
  %2505 = vdwg.mxu0
  %v2506 = vpack.c.bf16 %v2347, %v2347
  %v2507 = vpack.c.bf16 %v2349, %v2349
  %v2508 = vpack.c.bf16 %v2352, %v2352
  %v2509 = vpack.c.bf16 %v2354, %v2354
  %v2510 = vpack.c.bf16 %v2357, %v2357
  %v2511 = vpack.c.bf16 %v2359, %v2359
  %v2512 = vpack.c.bf16 %v2362, %v2362
  %v2513 = vpack.c.bf16 %v2364, %v2364
  %v2514 = vpack.c.bf16 %v2367, %v2367
  %v2515 = vpack.c.bf16 %v2369, %v2369
  %v2516 = vpack.c.bf16 %v2372, %v2372
  %v2517 = vpack.c.bf16 %v2374, %v2374
  %v2518 = vpack.c.bf16 %v2377, %v2377
  %v2519 = vpack.c.bf16 %v2379, %v2379
  %v2520 = vpack.c.bf16 %v2382, %v2382
  %v2521 = vpack.c.bf16 %v2384, %v2384
  %v2522 = vpack.c.bf16 %v2387, %v2387
  %v2523 = vpack.c.bf16 %v2389, %v2389
  %v2524 = vpack.c.bf16 %v2392, %v2392
  %v2525 = vpack.c.bf16 %v2394, %v2394
  %v2526 = vpack.c.bf16 %v2397, %v2397
  %v2527 = vpack.c.bf16 %v2399, %v2399
  %v2528 = vpack.c.bf16 %v2402, %v2402
  %v2529 = vpack.c.bf16 %v2404, %v2404
  %v2530 = vpack.c.bf16 %v2407, %v2407
  %v2531 = vpack.c.bf16 %v2409, %v2409
  %v2532 = vpack.c.bf16 %v2412, %v2412
  %v2533 = vpack.c.bf16 %v2414, %v2414
  %v2534 = vpack.c.bf16 %v2417, %v2417
  %v2535 = vpack.c.bf16 %v2419, %v2419
  %v2536 = vpack.c.bf16 %v2422, %v2422
  %v2537 = vpack.c.bf16 %v2424, %v2424
  %v2538 = vpack.c.bf16 %v2427, %v2427
  %v2539 = vpack.c.bf16 %v2429, %v2429
  %v2540 = vpack.c.bf16 %v2432, %v2432
  %v2541 = vpack.c.bf16 %v2434, %v2434
  %v2542 = vpack.c.bf16 %v2437, %v2437
  %v2543 = vpack.c.bf16 %v2439, %v2439
  %v2544 = vpack.c.bf16 %v2442, %v2442
  %v2545 = vpack.c.bf16 %v2444, %v2444
  %v2546 = vpack.c.bf16 %v2447, %v2447
  %v2547 = vpack.c.bf16 %v2449, %v2449
  %v2548 = vpack.c.bf16 %v2452, %v2452
  %v2549 = vpack.c.bf16 %v2454, %v2454
  %v2550 = vpack.c.bf16 %v2457, %v2457
  %v2551 = vpack.c.bf16 %v2459, %v2459
  %v2552 = vpack.c.bf16 %v2462, %v2462
  %v2553 = vpack.c.bf16 %v2464, %v2464
  %v2554 = vpack.c.bf16 %v2467, %v2467
  %v2555 = vpack.c.bf16 %v2469, %v2469
  %v2556 = vpack.c.bf16 %v2472, %v2472
  %v2557 = vpack.c.bf16 %v2474, %v2474
  %v2558 = vpack.c.bf16 %v2477, %v2477
  %v2559 = vpack.c.bf16 %v2479, %v2479
  %v2560 = vpack.c.bf16 %v2482, %v2482
  %v2561 = vpack.c.bf16 %v2484, %v2484
  %v2562 = vpack.c.bf16 %v2487, %v2487
  %v2563 = vpack.c.bf16 %v2489, %v2489
  %v2564 = vpack.c.bf16 %v2492, %v2492
  %v2565 = vpack.c.bf16 %v2494, %v2494
  %v2566 = vpack.c.bf16 %v2497, %v2497
  %v2567 = vpack.c.bf16 %v2499, %v2499
  %v2568 = vpack.c.bf16 %v2502, %v2502
  %v2569 = vpack.c.bf16 %v2504, %v2504
  %2570 = vst [vmem:[%s11] sm:$0xf] %v2506
  %2571 = vst [vmem:[%s11 + $0x4] sm:$0xf] %v2507
  %2572 = vst [vmem:[%s11 + $0x8] sm:$0xf] %v2508
  %2573 = vst [vmem:[%s11 + $0xc] sm:$0xf] %v2509
  %2574 = vst [vmem:[%s11 + $0x10] sm:$0xf] %v2510
  %2575 = vst [vmem:[%s11 + $0x14] sm:$0xf] %v2511
  %2576 = vst [vmem:[%s11 + $0x18] sm:$0xf] %v2512
  %2577 = vst [vmem:[%s11 + $0x1c] sm:$0xf] %v2513
  %2578 = vst [vmem:[%s11 + $0x20] sm:$0xf] %v2514
  %2579 = vst [vmem:[%s11 + $0x24] sm:$0xf] %v2515
  %2580 = vst [vmem:[%s11 + $0x28] sm:$0xf] %v2516
  %2581 = vst [vmem:[%s11 + $0x2c] sm:$0xf] %v2517
  %2582 = vst [vmem:[%s11 + $0x30] sm:$0xf] %v2518
  %2583 = vst [vmem:[%s11 + $0x34] sm:$0xf] %v2519
  %2584 = vst [vmem:[%s11 + $0x38] sm:$0xf] %v2520
  %2585 = vst [vmem:[%s11 + $0x3c] sm:$0xf] %v2521
  %2586 = vst [vmem:[%s11 + $0x40] sm:$0xf] %v2522
  %2587 = vst [vmem:[%s11 + $0x44] sm:$0xf] %v2523
  %2588 = vst [vmem:[%s11 + $0x48] sm:$0xf] %v2524
  %2589 = vst [vmem:[%s11 + $0x4c] sm:$0xf] %v2525
  %2590 = vst [vmem:[%s11 + $0x50] sm:$0xf] %v2526
  %2591 = vst [vmem:[%s11 + $0x54] sm:$0xf] %v2527
  %2592 = vst [vmem:[%s11 + $0x58] sm:$0xf] %v2528
  %2593 = vst [vmem:[%s11 + $0x5c] sm:$0xf] %v2529
  %2594 = vst [vmem:[%s11 + $0x60] sm:$0xf] %v2530
  %2595 = vst [vmem:[%s11 + $0x64] sm:$0xf] %v2531
  %2596 = vst [vmem:[%s11 + $0x68] sm:$0xf] %v2532
  %2597 = vst [vmem:[%s11 + $0x6c] sm:$0xf] %v2533
  %2598 = vst [vmem:[%s11 + $0x70] sm:$0xf] %v2534
  %2599 = vst [vmem:[%s11 + $0x74] sm:$0xf] %v2535
  %2600 = vst [vmem:[%s11 + $0x78] sm:$0xf] %v2536
  %2601 = vst [vmem:[%s11 + $0x7c] sm:$0xf] %v2537
  %2602 = vst [vmem:[%s11 + $0x80] sm:$0xf] %v2538
  %2603 = vst [vmem:[%s11 + $0x84] sm:$0xf] %v2539
  %2604 = vst [vmem:[%s11 + $0x88] sm:$0xf] %v2540
  %2605 = vst [vmem:[%s11 + $0x8c] sm:$0xf] %v2541
  %2606 = vst [vmem:[%s11 + $0x90] sm:$0xf] %v2542
  %2607 = vst [vmem:[%s11 + $0x94] sm:$0xf] %v2543
  %2608 = vst [vmem:[%s11 + $0x98] sm:$0xf] %v2544
  %2609 = vst [vmem:[%s11 + $0x9c] sm:$0xf] %v2545
  %2610 = vst [vmem:[%s11 + $0xa0] sm:$0xf] %v2546
  %2611 = vst [vmem:[%s11 + $0xa4] sm:$0xf] %v2547
  %2612 = vst [vmem:[%s11 + $0xa8] sm:$0xf] %v2548
  %2613 = vst [vmem:[%s11 + $0xac] sm:$0xf] %v2549
  %2614 = vst [vmem:[%s11 + $0xb0] sm:$0xf] %v2550
  %2615 = vst [vmem:[%s11 + $0xb4] sm:$0xf] %v2551
  %2616 = vst [vmem:[%s11 + $0xb8] sm:$0xf] %v2552
  %2617 = vst [vmem:[%s11 + $0xbc] sm:$0xf] %v2553
  %2618 = vst [vmem:[%s11 + $0xc0] sm:$0xf] %v2554
  %2619 = vst [vmem:[%s11 + $0xc4] sm:$0xf] %v2555
  %2620 = vst [vmem:[%s11 + $0xc8] sm:$0xf] %v2556
  %2621 = vst [vmem:[%s11 + $0xcc] sm:$0xf] %v2557
  %2622 = vst [vmem:[%s11 + $0xd0] sm:$0xf] %v2558
  %2623 = vst [vmem:[%s11 + $0xd4] sm:$0xf] %v2559
  %2624 = vst [vmem:[%s11 + $0xd8] sm:$0xf] %v2560
  %2625 = vst [vmem:[%s11 + $0xdc] sm:$0xf] %v2561
  %2626 = vst [vmem:[%s11 + $0xe0] sm:$0xf] %v2562
  %2627 = vst [vmem:[%s11 + $0xe4] sm:$0xf] %v2563
  %2628 = vst [vmem:[%s11 + $0xe8] sm:$0xf] %v2564
  %2629 = vst [vmem:[%s11 + $0xec] sm:$0xf] %v2565
  %2630 = vst [vmem:[%s11 + $0xf0] sm:$0xf] %v2566
  %2631 = vst [vmem:[%s11 + $0xf4] sm:$0xf] %v2567
  %2632 = vst [vmem:[%s11 + $0xf8] sm:$0xf] %v2568
  %2633 = vst [vmem:[%s11 + $0xfc] sm:$0xf] %v2569
  // Predicated region
  $region46: #{inference_net_forward.1} parent=0 // pred_check
    _
  $region47: #{inference_net_forward.1} parent=0 // pred_check_branch
    %2635 = sbr.rel (0) target = $region49
  $region48: #{inference_net_forward.1} parent=0 // pred_region
    _
  $region49: #{inference_net_forward.1} parent=0 // pred_fallthru
    _
  // Predicated region
  $region50: #{inference_net_forward.1} parent=0 // pred_check
    _
  $region51: #{inference_net_forward.1} parent=0 // pred_check_branch
    %2637 = sbr.rel (0) target = $region53
  $region52: #{inference_net_forward.1} parent=0 // pred_region
    _
  $region53: #{inference_net_forward.1} parent=0 // pred_fallthru
    _

</llo_original>
